<compile_context>
chip_gen: v7x
topology: tpu7x:2x2x1
jax: 0.10.0
libtpu: 0.0.40
codegen_flags: <defaults>
</compile_context>

<pallas_src>
import functools
import math

import jax
import jax.numpy as jnp
from jax.experimental import pallas as pl
from jax.experimental.pallas import tpu as pltpu


# ---------------------------------------------------------------------------
# Fused MHA kernel: one (batch, query-tile) grid step.
# ---------------------------------------------------------------------------
def _mha_kernel(vl_ref, q_ref, k_ref, v_ref, wq_ref, wk_ref, wv_ref, wo_ref,
                o_ref, k_scr, v_scr, acc_ref, *, num_heads, compute_dtype):
    # vl_ref : SMEM (B,) int32                (scalar-prefetched valid lengths)
    # q_ref  : VMEM (1, tq, Dq)
    # k_ref  : VMEM (1, Sk, Dk)
    # v_ref  : VMEM (1, Sk, Dv)
    # w*_ref : VMEM weights (W^T vs torch nn.Linear), already in compute_dtype
    # o_ref  : VMEM (1, tq, H)                (lane-dense output slab)
    # k_scr/v_scr : VMEM (Sk, H) compute_dtype  (K/V projections cached per batch)
    # acc_ref: VMEM (tq, H) f32               (output accumulator)
    b = pl.program_id(0)
    qi = pl.program_id(1)
    tq = q_ref.shape[1]
    sk = k_ref.shape[1]
    hid = wq_ref.shape[1]
    d = hid // num_heads
    scale = 1.0 / math.sqrt(d)
    cdt = compute_dtype

    # K / V projections: once per batch element, reused for every query tile.
    @pl.when(qi == 0)
    def _():
        k_scr[...] = jnp.dot(k_ref[0].astype(cdt), wk_ref[...],
                             preferred_element_type=jnp.float32).astype(cdt)
        v_scr[...] = jnp.dot(v_ref[0].astype(cdt), wv_ref[...],
                             preferred_element_type=jnp.float32).astype(cdt)

    # Q projection; scale once on the (tq, H) tile (hoisted out of head loop).
    q = jnp.dot(q_ref[0].astype(cdt), wq_ref[...],
                preferred_element_type=jnp.float32) * scale
    q = q.astype(cdt)

    k_all = k_scr[...]                                   # (Sk, H) compute_dtype
    v_all = v_scr[...]                                   # (Sk, H) compute_dtype

    # masked_softmax as an additive bias shared by all heads / query rows.
    # (key index >= valid_len -> -1e6; matches the torch reference up to the
    #  degenerate valid_len == 0 case where both produce garbage rows.)
    valid = vl_ref[b]                                    # int32 scalar (SMEM)
    col = jax.lax.broadcasted_iota(jnp.int32, (1, sk), 1)
    bias = jnp.where(col < valid, jnp.float32(0.0), jnp.float32(-1e6))  # (1, Sk)

    for h in range(num_heads):                           # static unroll
        lo = h * d
        qh = q[:, lo:lo + d]                             # (tq, d)
        kh = k_all[:, lo:lo + d]                         # (Sk, d)
        vh = v_all[:, lo:lo + d]                         # (Sk, d)

        s = jax.lax.dot_general(                         # q @ k^T  (f32 acc)
            qh, kh, (((1,), (1,)), ((), ())),
            preferred_element_type=jnp.float32)          # (tq, Sk)
        s = s + bias
        s = s - jnp.max(s, axis=-1, keepdims=True)
        p = jnp.exp(s)
        p = p * pl.reciprocal(jnp.sum(p, axis=-1, keepdims=True), approx=True)

        oh = jnp.dot(p.astype(cdt), vh,
                     preferred_element_type=jnp.float32)  # (tq, d)
        # Accumulate this head's contribution against its W_o row block:
        # equivalent to concat(heads) @ W_o, but with bounded live ranges and
        # no sub-vreg concatenate.
        contrib = jnp.dot(oh.astype(cdt), wo_ref[lo:lo + d, :],
                          preferred_element_type=jnp.float32)  # (tq, H)
        if h == 0:
            acc_ref[...] = contrib
        else:
            acc_ref[...] += contrib

    o_ref[0] = acc_ref[...].astype(o_ref.dtype)


# ---------------------------------------------------------------------------
# Wrapper: builds the grid / BlockSpecs and calls the fused kernel once.
# ---------------------------------------------------------------------------
def multi_head_attention(params, queries, keys, values, valid_lens, num_heads,
                         *, compute_dtype=jnp.bfloat16, tq_max=128):
    wq, wk, wv, wo = params["W_q"], params["W_k"], params["W_v"], params["W_o"]
    b, sq, dq = queries.shape
    sk, dk = keys.shape[1], keys.shape[2]
    dv = values.shape[2]
    hid = wq.shape[1]
    assert hid % num_heads == 0

    cdt = compute_dtype
    # Cast weights ONCE here (not per grid step in the kernel): halves weight
    # DMA bytes and VMEM residency on the bf16 path.
    wq_c, wk_c, wv_c, wo_c = (w.astype(cdt) for w in (wq, wk, wv, wo))

    # Query-row tiling: cap at tq_max (128 fits v7x's 64 MiB VMEM at BERT hid),
    # cdiv grid handles non-divisible Sq via padded tail blocks.
    tq = min(sq, tq_max)
    nq = pl.cdiv(sq, tq)

    if valid_lens is None:
        vl = jnp.full((b,), sk, dtype=jnp.int32)         # mask never triggers
    elif valid_lens.ndim == 1:
        vl = valid_lens.astype(jnp.int32)
    else:
        # TODO(synk): per-query (B, Sq) valid_lens path of masked_softmax.
        raise NotImplementedError("2-D valid_lens not supported by fused kernel")

    kernel = functools.partial(_mha_kernel, num_heads=num_heads,
                               compute_dtype=cdt)

    # Constant-index weight blocks: single-buffer them (double-buffering a
    # never-changing block is pure VMEM waste -- matters most on v7x).
    def wspec(shape):
        return pl.BlockSpec(shape, lambda bi, qi, vl_s: (0, 0),
                            pipeline_mode=pl.Buffered(1))

    return pl.pallas_call(
        kernel,
        out_shape=jax.ShapeDtypeStruct((b, sq, hid), queries.dtype),
        grid_spec=pltpu.PrefetchScalarGridSpec(
            num_scalar_prefetch=1,
            grid=(b, nq),
            in_specs=[
                pl.BlockSpec((1, tq, dq), lambda bi, qi, vl_s: (bi, qi, 0)),
                pl.BlockSpec((1, sk, dk), lambda bi, qi, vl_s: (bi, 0, 0)),
                pl.BlockSpec((1, sk, dv), lambda bi, qi, vl_s: (bi, 0, 0)),
                wspec((dq, hid)),
                wspec((dk, hid)),
                wspec((dv, hid)),
                wspec((hid, hid)),
            ],
            out_specs=pl.BlockSpec((1, tq, hid), lambda bi, qi, vl_s: (bi, qi, 0)),
            scratch_shapes=[
                pltpu.VMEM((sk, hid), cdt),           # cached K projection
                pltpu.VMEM((sk, hid), cdt),           # cached V projection
                pltpu.VMEM((tq, hid), jnp.float32),   # f32 output accumulator
            ],
        ),
        compiler_params=pltpu.CompilerParams(
            # batch axis shardable across TensorCores; query-tile axis must be
            # sequential so the qi==0 K/V-projection cache is valid.
            dimension_semantics=("parallel", "arbitrary"),
            # Explicit scoped-VMEM limit: above v5e's 16 MiB default, below
            # v7x's 64 MiB physical VMEM.
            vmem_limit_bytes=56 * 1024 * 1024,
        ),
    )(vl, queries, keys, values, wq_c, wk_c, wv_c, wo_c)


# ---------------------------------------------------------------------------
# Pure-JAX reference (matches the PyTorch module's forward, eval mode)
# ---------------------------------------------------------------------------
def transpose_qkv(x, num_heads):
    b, s, h = x.shape
    x = x.reshape(b, s, num_heads, h // num_heads)
    x = jnp.transpose(x, (0, 2, 1, 3))
    return x.reshape(b * num_heads, s, h // num_heads)


def transpose_output(x, num_heads):
    bh, s, d = x.shape
    x = x.reshape(bh // num_heads, num_heads, s, d)
    x = jnp.transpose(x, (0, 2, 1, 3))
    return x.reshape(x.shape[0], x.shape[1], num_heads * d)


def reference_mha(params, queries, keys, values, valid_lens, num_heads):
    hp = jax.lax.Precision.HIGHEST
    wq, wk, wv, wo = params["W_q"], params["W_k"], params["W_v"], params["W_o"]
    q = transpose_qkv(jnp.einsum("bsd,dh->bsh", queries, wq, precision=hp), num_heads)
    k = transpose_qkv(jnp.einsum("bsd,dh->bsh", keys, wk, precision=hp), num_heads)
    v = transpose_qkv(jnp.einsum("bsd,dh->bsh", values, wv, precision=hp), num_heads)
    d = q.shape[-1]
    scores = jnp.einsum("bqd,bkd->bqk", q, k, precision=hp) / math.sqrt(d)
    if valid_lens is not None:
        vl = jnp.repeat(valid_lens, num_heads, axis=0)
        col = jnp.arange(scores.shape[-1])
        mask = col[None, None, :] < vl[:, None, None]
        scores = jnp.where(mask, scores, -1e6)
    p = jax.nn.softmax(scores, axis=-1)
    out = jnp.einsum("bqk,bkd->bqd", p, v, precision=hp)
    return jnp.einsum("bsd,dh->bsh", transpose_output(out, num_heads), wo,
                      precision=hp)


# ---------------------------------------------------------------------------
if __name__ == "__main__":
    # NOTE: demo shapes are tiny (overhead-bound); the tiling / caching changes
    # only pay off at BERT-sized Sq/Sk/hid.
    key_size = query_size = value_size = 64
    num_hiddens = 128        # multiple of 128 -> lane-dense output stores
    num_heads = 4            # head_dim = 32
    B, Sq, Sk = 2, 8, 8

    root = jax.random.PRNGKey(0)
    ks = jax.random.split(root, 8)

    # nn.Linear(in, out, bias=False) weight is (out, in); we store W^T: (in, out)
    params = {
        "W_q": 0.05 * jax.random.normal(ks[0], (query_size, num_hiddens), jnp.float32),
        "W_k": 0.05 * jax.random.normal(ks[1], (key_size, num_hiddens), jnp.float32),
        "W_v": 0.05 * jax.random.normal(ks[2], (value_size, num_hiddens), jnp.float32),
        "W_o": 0.05 * jax.random.normal(ks[3], (num_hiddens, num_hiddens), jnp.float32),
    }

    queries = jax.random.normal(ks[4], (B, Sq, query_size), jnp.float32)
    keys = jax.random.normal(ks[5], (B, Sk, key_size), jnp.float32)
    values = jax.random.normal(ks[6], (B, Sk, value_size), jnp.float32)
    valid_lens = jnp.array([3, 6], dtype=jnp.int32)

    ref = reference_mha(params, queries, keys, values, valid_lens, num_heads)

    # Default path: bf16 MXU operands, f32 accumulation / softmax, masked.
    out = multi_head_attention(params, queries, keys, values, valid_lens, num_heads)
    out = jax.block_until_ready(out)
    assert out.shape == (B, Sq, num_hiddens)
    assert jnp.allclose(out, ref, atol=5e-2, rtol=5e-2), "bf16 masked mismatch"

    # f32 opt-in path (bit-tight vs reference), masked.
    out_f32 = multi_head_attention(params, queries, keys, values, valid_lens,
                                   num_heads, compute_dtype=jnp.float32)
    out_f32 = jax.block_until_ready(out_f32)
    assert jnp.allclose(out_f32, ref, atol=5e-3, rtol=5e-3), "f32 masked mismatch"

    # f32, no mask (valid_lens=None branch of masked_softmax).
    out_nm = multi_head_attention(params, queries, keys, values, None, num_heads,
                                  compute_dtype=jnp.float32)
    out_nm = jax.block_until_ready(out_nm)
    ref_nm = reference_mha(params, queries, keys, values, None, num_heads)
    assert jnp.allclose(out_nm, ref_nm, atol=5e-3, rtol=5e-3), "f32 unmasked mismatch"

    print("KERNEL_OK")
</pallas_src>

<mosaic_0001>
module attributes {stable_mosaic.version = 11 : i64} {
  func.func @_mha_kernel(%arg0: i32, %arg1: i32, %arg2: memref<2xi32, #tpu.memory_space<smem>>, %arg3: memref<1x8x64xf32, #tpu.memory_space<vmem>>, %arg4: memref<1x8x64xf32, #tpu.memory_space<vmem>>, %arg5: memref<1x8x64xf32, #tpu.memory_space<vmem>>, %arg6: memref<64x128xbf16, #tpu.memory_space<vmem>>, %arg7: memref<64x128xbf16, #tpu.memory_space<vmem>>, %arg8: memref<64x128xbf16, #tpu.memory_space<vmem>>, %arg9: memref<128x128xbf16, #tpu.memory_space<vmem>>, %arg10: memref<1x8x128xf32, #tpu.memory_space<vmem>>, %arg11: memref<8x128xbf16, #tpu.memory_space<vmem>>, %arg12: memref<8x128xbf16, #tpu.memory_space<vmem>>, %arg13: memref<8x128xf32, #tpu.memory_space<vmem>>) attributes {dimension_semantics = [#tpu.dimension_semantics<parallel>, #tpu.dimension_semantics<arbitrary>], iteration_bounds = array<i64: 2, 1>, scalar_prefetch = 1 : i64, scratch_operands = 3 : i64, tpu.core_type = #tpu.core_type<tc>, window_params = [{transform_indices = @transform_0, window_bounds = array<i64: 1, 8, 64>}, {transform_indices = @transform_1, window_bounds = array<i64: 1, 8, 64>}, {transform_indices = @transform_2, window_bounds = array<i64: 1, 8, 64>}, {pipeline_mode = #tpu.pipeline_mode<synchronous>, transform_indices = @transform_3, window_bounds = array<i64: 64, 128>}, {pipeline_mode = #tpu.pipeline_mode<synchronous>, transform_indices = @transform_4, window_bounds = array<i64: 64, 128>}, {pipeline_mode = #tpu.pipeline_mode<synchronous>, transform_indices = @transform_5, window_bounds = array<i64: 64, 128>}, {pipeline_mode = #tpu.pipeline_mode<synchronous>, transform_indices = @transform_6, window_bounds = array<i64: 128, 128>}, {transform_indices = @transform_7, window_bounds = array<i64: 1, 8, 128>}]} {
    %c0_i32 = arith.constant 0 : i32
    %0 = arith.cmpi eq, %arg1, %c0_i32 : i32
    %1 = arith.extui %0 : i1 to i32
    %c0_i32_0 = arith.constant 0 : i32
    %2 = arith.cmpi ne, %1, %c0_i32_0 : i32
    scf.if %2 {
      %c0_56 = arith.constant 0 : index
      %c0_57 = arith.constant 0 : index
      %c0_58 = arith.constant 0 : index
      %119 = vector.load %arg4[%c0_56, %c0_57, %c0_58] : memref<1x8x64xf32, #tpu.memory_space<vmem>>, vector<1x8x64xf32>
      %120 = vector.shape_cast %119 : vector<1x8x64xf32> to vector<8x64xf32>
      %121 = arith.truncf %120 : vector<8x64xf32> to vector<8x64xbf16>
      %c0_59 = arith.constant 0 : index
      %c0_60 = arith.constant 0 : index
      %122 = vector.load %arg7[%c0_59, %c0_60] : memref<64x128xbf16, #tpu.memory_space<vmem>>, vector<64x128xbf16>
      %cst_61 = arith.constant dense<0.000000e+00> : vector<8x128xf32>
      %123 = tpu.matmul %121, %122, %cst_61 {dimension_numbers = #tpu.dot_dimension_numbers<[1], [0], [0], [1], [0, 0, 1, 1], [], []>} : vector<8x64xbf16>, vector<64x128xbf16>, vector<8x128xf32> -> vector<8x128xf32>
      %124 = arith.truncf %123 : vector<8x128xf32> to vector<8x128xbf16>
      %c0_62 = arith.constant 0 : index
      %c0_63 = arith.constant 0 : index
      %125 = vector.load %arg11[%c0_62, %c0_63] : memref<8x128xbf16, #tpu.memory_space<vmem>>, vector<8x128xbf16>
      tpu.vector_store %arg11[%c0_62, %c0_63], %124 {strides = array<i32>} : memref<8x128xbf16, #tpu.memory_space<vmem>>, vector<8x128xbf16>,
      %c0_64 = arith.constant 0 : index
      %c0_65 = arith.constant 0 : index
      %c0_66 = arith.constant 0 : index
      %126 = vector.load %arg5[%c0_64, %c0_65, %c0_66] : memref<1x8x64xf32, #tpu.memory_space<vmem>>, vector<1x8x64xf32>
      %127 = vector.shape_cast %126 : vector<1x8x64xf32> to vector<8x64xf32>
      %128 = arith.truncf %127 : vector<8x64xf32> to vector<8x64xbf16>
      %c0_67 = arith.constant 0 : index
      %c0_68 = arith.constant 0 : index
      %129 = vector.load %arg8[%c0_67, %c0_68] : memref<64x128xbf16, #tpu.memory_space<vmem>>, vector<64x128xbf16>
      %cst_69 = arith.constant dense<0.000000e+00> : vector<8x128xf32>
      %130 = tpu.matmul %128, %129, %cst_69 {dimension_numbers = #tpu.dot_dimension_numbers<[1], [0], [0], [1], [0, 0, 1, 1], [], []>} : vector<8x64xbf16>, vector<64x128xbf16>, vector<8x128xf32> -> vector<8x128xf32>
      %131 = arith.truncf %130 : vector<8x128xf32> to vector<8x128xbf16>
      %c0_70 = arith.constant 0 : index
      %c0_71 = arith.constant 0 : index
      %132 = vector.load %arg12[%c0_70, %c0_71] : memref<8x128xbf16, #tpu.memory_space<vmem>>, vector<8x128xbf16>
      tpu.vector_store %arg12[%c0_70, %c0_71], %131 {strides = array<i32>} : memref<8x128xbf16, #tpu.memory_space<vmem>>, vector<8x128xbf16>,
    } else {
    }
    %c0 = arith.constant 0 : index
    %c0_1 = arith.constant 0 : index
    %c0_2 = arith.constant 0 : index
    %3 = vector.load %arg3[%c0, %c0_1, %c0_2] : memref<1x8x64xf32, #tpu.memory_space<vmem>>, vector<1x8x64xf32>
    %4 = vector.shape_cast %3 : vector<1x8x64xf32> to vector<8x64xf32>
    %5 = arith.truncf %4 : vector<8x64xf32> to vector<8x64xbf16>
    %c0_3 = arith.constant 0 : index
    %c0_4 = arith.constant 0 : index
    %6 = vector.load %arg6[%c0_3, %c0_4] : memref<64x128xbf16, #tpu.memory_space<vmem>>, vector<64x128xbf16>
    %cst = arith.constant dense<0.000000e+00> : vector<8x128xf32>
    %7 = tpu.matmul %5, %6, %cst {dimension_numbers = #tpu.dot_dimension_numbers<[1], [0], [0], [1], [0, 0, 1, 1], [], []>} : vector<8x64xbf16>, vector<64x128xbf16>, vector<8x128xf32> -> vector<8x128xf32>
    %cst_5 = arith.constant 0.176776692 : f32
    %8 = vector.broadcast %cst_5 : f32 to vector<8x128xf32>
    %9 = arith.mulf %7, %8 : vector<8x128xf32>
    %10 = arith.truncf %9 : vector<8x128xf32> to vector<8x128xbf16>
    %c0_6 = arith.constant 0 : index
    %c0_7 = arith.constant 0 : index
    %11 = vector.load %arg11[%c0_6, %c0_7] : memref<8x128xbf16, #tpu.memory_space<vmem>>, vector<8x128xbf16>
    %c0_8 = arith.constant 0 : index
    %c0_9 = arith.constant 0 : index
    %12 = vector.load %arg12[%c0_8, %c0_9] : memref<8x128xbf16, #tpu.memory_space<vmem>>, vector<8x128xbf16>
    %13 = arith.index_cast %arg0 : i32 to index
    %14 = memref.load %arg2[%13] : memref<2xi32, #tpu.memory_space<smem>>
    %15 = tpu.iota {dimensions = array<i32: 1>} : vector<1x8xi32>
    %16 = vector.broadcast %14 : i32 to vector<1x8xi32>
    %17 = arith.cmpi slt, %15, %16 : vector<1x8xi32>
    %cst_10 = arith.constant 0.000000e+00 : f32
    %cst_11 = arith.constant -1.000000e+06 : f32
    %18 = vector.broadcast %cst_10 : f32 to vector<1x8xf32>
    %19 = vector.broadcast %cst_11 : f32 to vector<1x8xf32>
    %20 = arith.select %17, %18, %19 : vector<1x8xi1>, vector<1x8xf32>
    %21 = vector.extract_strided_slice %10 {offsets = [0, 0], sizes = [8, 32], strides = [1, 1]} : vector<8x128xbf16> to vector<8x32xbf16>
    %22 = vector.extract_strided_slice %11 {offsets = [0, 0], sizes = [8, 32], strides = [1, 1]} : vector<8x128xbf16> to vector<8x32xbf16>
    %23 = vector.extract_strided_slice %12 {offsets = [0, 0], sizes = [8, 32], strides = [1, 1]} : vector<8x128xbf16> to vector<8x32xbf16>
    %cst_12 = arith.constant dense<0.000000e+00> : vector<8x8xf32>
    %24 = tpu.matmul %21, %22, %cst_12 {dimension_numbers = #tpu.dot_dimension_numbers<[1], [1], [0], [0], [0, 0, 1, 0], [], []>} : vector<8x32xbf16>, vector<8x32xbf16>, vector<8x8xf32> -> vector<8x8xf32>
    %25 = vector.broadcast %20 : vector<1x8xf32> to vector<8x8xf32>
    %26 = arith.addf %24, %25 : vector<8x8xf32>
    %cst_13 = arith.constant dense<0xFF800000> : vector<8xf32>
    %27 = vector.multi_reduction <maximumf>, %26, %cst_13 [1] : vector<8x8xf32> to vector<8xf32>
    %28 = vector.shape_cast %27 : vector<8xf32> to vector<8x1xf32>
    %29 = vector.broadcast %28 : vector<8x1xf32> to vector<8x8xf32>
    %30 = arith.subf %26, %29 : vector<8x8xf32>
    %31 = math.exp %30 : vector<8x8xf32>
    %cst_14 = arith.constant dense<0.000000e+00> : vector<8xf32>
    %32 = vector.multi_reduction <add>, %31, %cst_14 [1] : vector<8x8xf32> to vector<8xf32>
    %33 = vector.shape_cast %32 : vector<8xf32> to vector<8x1xf32>
    %34 = tpu.reciprocal %33 {approx = true} : vector<8x1xf32> -> vector<8x1xf32>
    %35 = vector.broadcast %34 : vector<8x1xf32> to vector<8x8xf32>
    %36 = arith.mulf %31, %35 : vector<8x8xf32>
    %37 = arith.truncf %36 : vector<8x8xf32> to vector<8x8xbf16>
    %cst_15 = arith.constant dense<0.000000e+00> : vector<8x32xf32>
    %38 = tpu.matmul %37, %23, %cst_15 {dimension_numbers = #tpu.dot_dimension_numbers<[1], [0], [0], [1], [0, 0, 1, 1], [], []>} : vector<8x8xbf16>, vector<8x32xbf16>, vector<8x32xf32> -> vector<8x32xf32>
    %39 = arith.truncf %38 : vector<8x32xf32> to vector<8x32xbf16>
    %c0_16 = arith.constant 0 : index
    %c0_17 = arith.constant 0 : index
    %40 = vector.load %arg9[%c0_16, %c0_17] : memref<128x128xbf16, #tpu.memory_space<vmem>>, vector<32x128xbf16>
    %cst_18 = arith.constant dense<0.000000e+00> : vector<8x128xf32>
    %41 = tpu.matmul %39, %40, %cst_18 {dimension_numbers = #tpu.dot_dimension_numbers<[1], [0], [0], [1], [0, 0, 1, 1], [], []>} : vector<8x32xbf16>, vector<32x128xbf16>, vector<8x128xf32> -> vector<8x128xf32>
    %c0_19 = arith.constant 0 : index
    %c0_20 = arith.constant 0 : index
    %42 = vector.load %arg13[%c0_19, %c0_20] : memref<8x128xf32, #tpu.memory_space<vmem>>, vector<8x128xf32>
    tpu.vector_store %arg13[%c0_19, %c0_20], %41 {strides = array<i32>} : memref<8x128xf32, #tpu.memory_space<vmem>>, vector<8x128xf32>,
    %43 = vector.extract_strided_slice %10 {offsets = [0, 32], sizes = [8, 32], strides = [1, 1]} : vector<8x128xbf16> to vector<8x32xbf16>
    %44 = vector.extract_strided_slice %11 {offsets = [0, 32], sizes = [8, 32], strides = [1, 1]} : vector<8x128xbf16> to vector<8x32xbf16>
    %45 = vector.extract_strided_slice %12 {offsets = [0, 32], sizes = [8, 32], strides = [1, 1]} : vector<8x128xbf16> to vector<8x32xbf16>
    %cst_21 = arith.constant dense<0.000000e+00> : vector<8x8xf32>
    %46 = tpu.matmul %43, %44, %cst_21 {dimension_numbers = #tpu.dot_dimension_numbers<[1], [1], [0], [0], [0, 0, 1, 0], [], []>} : vector<8x32xbf16>, vector<8x32xbf16>, vector<8x8xf32> -> vector<8x8xf32>
    %47 = vector.broadcast %20 : vector<1x8xf32> to vector<8x8xf32>
    %48 = arith.addf %46, %47 : vector<8x8xf32>
    %cst_22 = arith.constant dense<0xFF800000> : vector<8xf32>
    %49 = vector.multi_reduction <maximumf>, %48, %cst_22 [1] : vector<8x8xf32> to vector<8xf32>
    %50 = vector.shape_cast %49 : vector<8xf32> to vector<8x1xf32>
    %51 = vector.broadcast %50 : vector<8x1xf32> to vector<8x8xf32>
    %52 = arith.subf %48, %51 : vector<8x8xf32>
    %53 = math.exp %52 : vector<8x8xf32>
    %cst_23 = arith.constant dense<0.000000e+00> : vector<8xf32>
    %54 = vector.multi_reduction <add>, %53, %cst_23 [1] : vector<8x8xf32> to vector<8xf32>
    %55 = vector.shape_cast %54 : vector<8xf32> to vector<8x1xf32>
    %56 = tpu.reciprocal %55 {approx = true} : vector<8x1xf32> -> vector<8x1xf32>
    %57 = vector.broadcast %56 : vector<8x1xf32> to vector<8x8xf32>
    %58 = arith.mulf %53, %57 : vector<8x8xf32>
    %59 = arith.truncf %58 : vector<8x8xf32> to vector<8x8xbf16>
    %cst_24 = arith.constant dense<0.000000e+00> : vector<8x32xf32>
    %60 = tpu.matmul %59, %45, %cst_24 {dimension_numbers = #tpu.dot_dimension_numbers<[1], [0], [0], [1], [0, 0, 1, 1], [], []>} : vector<8x8xbf16>, vector<8x32xbf16>, vector<8x32xf32> -> vector<8x32xf32>
    %61 = arith.truncf %60 : vector<8x32xf32> to vector<8x32xbf16>
    %c32 = arith.constant 32 : index
    %c0_25 = arith.constant 0 : index
    %62 = vector.load %arg9[%c32, %c0_25] : memref<128x128xbf16, #tpu.memory_space<vmem>>, vector<32x128xbf16>
    %cst_26 = arith.constant dense<0.000000e+00> : vector<8x128xf32>
    %63 = tpu.matmul %61, %62, %cst_26 {dimension_numbers = #tpu.dot_dimension_numbers<[1], [0], [0], [1], [0, 0, 1, 1], [], []>} : vector<8x32xbf16>, vector<32x128xbf16>, vector<8x128xf32> -> vector<8x128xf32>
    %c0_27 = arith.constant 0 : index
    %c0_28 = arith.constant 0 : index
    %64 = vector.load %arg13[%c0_27, %c0_28] : memref<8x128xf32, #tpu.memory_space<vmem>>, vector<8x128xf32>
    %65 = arith.addf %64, %63 : vector<8x128xf32>
    %c0_29 = arith.constant 0 : index
    %c0_30 = arith.constant 0 : index
    %66 = vector.load %arg13[%c0_29, %c0_30] : memref<8x128xf32, #tpu.memory_space<vmem>>, vector<8x128xf32>
    tpu.vector_store %arg13[%c0_29, %c0_30], %65 {strides = array<i32>} : memref<8x128xf32, #tpu.memory_space<vmem>>, vector<8x128xf32>,
    %67 = vector.extract_strided_slice %10 {offsets = [0, 64], sizes = [8, 32], strides = [1, 1]} : vector<8x128xbf16> to vector<8x32xbf16>
    %68 = vector.extract_strided_slice %11 {offsets = [0, 64], sizes = [8, 32], strides = [1, 1]} : vector<8x128xbf16> to vector<8x32xbf16>
    %69 = vector.extract_strided_slice %12 {offsets = [0, 64], sizes = [8, 32], strides = [1, 1]} : vector<8x128xbf16> to vector<8x32xbf16>
    %cst_31 = arith.constant dense<0.000000e+00> : vector<8x8xf32>
    %70 = tpu.matmul %67, %68, %cst_31 {dimension_numbers = #tpu.dot_dimension_numbers<[1], [1], [0], [0], [0, 0, 1, 0], [], []>} : vector<8x32xbf16>, vector<8x32xbf16>, vector<8x8xf32> -> vector<8x8xf32>
    %71 = vector.broadcast %20 : vector<1x8xf32> to vector<8x8xf32>
    %72 = arith.addf %70, %71 : vector<8x8xf32>
    %cst_32 = arith.constant dense<0xFF800000> : vector<8xf32>
    %73 = vector.multi_reduction <maximumf>, %72, %cst_32 [1] : vector<8x8xf32> to vector<8xf32>
    %74 = vector.shape_cast %73 : vector<8xf32> to vector<8x1xf32>
    %75 = vector.broadcast %74 : vector<8x1xf32> to vector<8x8xf32>
    %76 = arith.subf %72, %75 : vector<8x8xf32>
    %77 = math.exp %76 : vector<8x8xf32>
    %cst_33 = arith.constant dense<0.000000e+00> : vector<8xf32>
    %78 = vector.multi_reduction <add>, %77, %cst_33 [1] : vector<8x8xf32> to vector<8xf32>
    %79 = vector.shape_cast %78 : vector<8xf32> to vector<8x1xf32>
    %80 = tpu.reciprocal %79 {approx = true} : vector<8x1xf32> -> vector<8x1xf32>
    %81 = vector.broadcast %80 : vector<8x1xf32> to vector<8x8xf32>
    %82 = arith.mulf %77, %81 : vector<8x8xf32>
    %83 = arith.truncf %82 : vector<8x8xf32> to vector<8x8xbf16>
    %cst_34 = arith.constant dense<0.000000e+00> : vector<8x32xf32>
    %84 = tpu.matmul %83, %69, %cst_34 {dimension_numbers = #tpu.dot_dimension_numbers<[1], [0], [0], [1], [0, 0, 1, 1], [], []>} : vector<8x8xbf16>, vector<8x32xbf16>, vector<8x32xf32> -> vector<8x32xf32>
    %85 = arith.truncf %84 : vector<8x32xf32> to vector<8x32xbf16>
    %c64 = arith.constant 64 : index
    %c0_35 = arith.constant 0 : index
    %86 = vector.load %arg9[%c64, %c0_35] : memref<128x128xbf16, #tpu.memory_space<vmem>>, vector<32x128xbf16>
    %cst_36 = arith.constant dense<0.000000e+00> : vector<8x128xf32>
    %87 = tpu.matmul %85, %86, %cst_36 {dimension_numbers = #tpu.dot_dimension_numbers<[1], [0], [0], [1], [0, 0, 1, 1], [], []>} : vector<8x32xbf16>, vector<32x128xbf16>, vector<8x128xf32> -> vector<8x128xf32>
    %c0_37 = arith.constant 0 : index
    %c0_38 = arith.constant 0 : index
    %88 = vector.load %arg13[%c0_37, %c0_38] : memref<8x128xf32, #tpu.memory_space<vmem>>, vector<8x128xf32>
    %89 = arith.addf %88, %87 : vector<8x128xf32>
    %c0_39 = arith.constant 0 : index
    %c0_40 = arith.constant 0 : index
    %90 = vector.load %arg13[%c0_39, %c0_40] : memref<8x128xf32, #tpu.memory_space<vmem>>, vector<8x128xf32>
    tpu.vector_store %arg13[%c0_39, %c0_40], %89 {strides = array<i32>} : memref<8x128xf32, #tpu.memory_space<vmem>>, vector<8x128xf32>,
    %91 = vector.extract_strided_slice %10 {offsets = [0, 96], sizes = [8, 32], strides = [1, 1]} : vector<8x128xbf16> to vector<8x32xbf16>
    %92 = vector.extract_strided_slice %11 {offsets = [0, 96], sizes = [8, 32], strides = [1, 1]} : vector<8x128xbf16> to vector<8x32xbf16>
    %93 = vector.extract_strided_slice %12 {offsets = [0, 96], sizes = [8, 32], strides = [1, 1]} : vector<8x128xbf16> to vector<8x32xbf16>
    %cst_41 = arith.constant dense<0.000000e+00> : vector<8x8xf32>
    %94 = tpu.matmul %91, %92, %cst_41 {dimension_numbers = #tpu.dot_dimension_numbers<[1], [1], [0], [0], [0, 0, 1, 0], [], []>} : vector<8x32xbf16>, vector<8x32xbf16>, vector<8x8xf32> -> vector<8x8xf32>
    %95 = vector.broadcast %20 : vector<1x8xf32> to vector<8x8xf32>
    %96 = arith.addf %94, %95 : vector<8x8xf32>
    %cst_42 = arith.constant dense<0xFF800000> : vector<8xf32>
    %97 = vector.multi_reduction <maximumf>, %96, %cst_42 [1] : vector<8x8xf32> to vector<8xf32>
    %98 = vector.shape_cast %97 : vector<8xf32> to vector<8x1xf32>
    %99 = vector.broadcast %98 : vector<8x1xf32> to vector<8x8xf32>
    %100 = arith.subf %96, %99 : vector<8x8xf32>
    %101 = math.exp %100 : vector<8x8xf32>
    %cst_43 = arith.constant dense<0.000000e+00> : vector<8xf32>
    %102 = vector.multi_reduction <add>, %101, %cst_43 [1] : vector<8x8xf32> to vector<8xf32>
    %103 = vector.shape_cast %102 : vector<8xf32> to vector<8x1xf32>
    %104 = tpu.reciprocal %103 {approx = true} : vector<8x1xf32> -> vector<8x1xf32>
    %105 = vector.broadcast %104 : vector<8x1xf32> to vector<8x8xf32>
    %106 = arith.mulf %101, %105 : vector<8x8xf32>
    %107 = arith.truncf %106 : vector<8x8xf32> to vector<8x8xbf16>
    %cst_44 = arith.constant dense<0.000000e+00> : vector<8x32xf32>
    %108 = tpu.matmul %107, %93, %cst_44 {dimension_numbers = #tpu.dot_dimension_numbers<[1], [0], [0], [1], [0, 0, 1, 1], [], []>} : vector<8x8xbf16>, vector<8x32xbf16>, vector<8x32xf32> -> vector<8x32xf32>
    %109 = arith.truncf %108 : vector<8x32xf32> to vector<8x32xbf16>
    %c96 = arith.constant 96 : index
    %c0_45 = arith.constant 0 : index
    %110 = vector.load %arg9[%c96, %c0_45] : memref<128x128xbf16, #tpu.memory_space<vmem>>, vector<32x128xbf16>
    %cst_46 = arith.constant dense<0.000000e+00> : vector<8x128xf32>
    %111 = tpu.matmul %109, %110, %cst_46 {dimension_numbers = #tpu.dot_dimension_numbers<[1], [0], [0], [1], [0, 0, 1, 1], [], []>} : vector<8x32xbf16>, vector<32x128xbf16>, vector<8x128xf32> -> vector<8x128xf32>
    %c0_47 = arith.constant 0 : index
    %c0_48 = arith.constant 0 : index
    %112 = vector.load %arg13[%c0_47, %c0_48] : memref<8x128xf32, #tpu.memory_space<vmem>>, vector<8x128xf32>
    %113 = arith.addf %112, %111 : vector<8x128xf32>
    %c0_49 = arith.constant 0 : index
    %c0_50 = arith.constant 0 : index
    %114 = vector.load %arg13[%c0_49, %c0_50] : memref<8x128xf32, #tpu.memory_space<vmem>>, vector<8x128xf32>
    tpu.vector_store %arg13[%c0_49, %c0_50], %113 {strides = array<i32>} : memref<8x128xf32, #tpu.memory_space<vmem>>, vector<8x128xf32>,
    %c0_51 = arith.constant 0 : index
    %c0_52 = arith.constant 0 : index
    %115 = vector.load %arg13[%c0_51, %c0_52] : memref<8x128xf32, #tpu.memory_space<vmem>>, vector<8x128xf32>
    %c0_53 = arith.constant 0 : index
    %c0_54 = arith.constant 0 : index
    %c0_55 = arith.constant 0 : index
    %116 = vector.load %arg10[%c0_53, %c0_54, %c0_55] : memref<1x8x128xf32, #tpu.memory_space<vmem>>, vector<1x8x128xf32>
    %117 = vector.shape_cast %116 : vector<1x8x128xf32> to vector<8x128xf32>
    %118 = vector.shape_cast %115 : vector<8x128xf32> to vector<1x8x128xf32>
    tpu.vector_store %arg10[%c0_53, %c0_54, %c0_55], %118 {strides = array<i32>} : memref<1x8x128xf32, #tpu.memory_space<vmem>>, vector<1x8x128xf32>,
    return
  }
  func.func @transform_0(%arg0: i32, %arg1: i32, %arg2: memref<2xi32, #tpu.memory_space<smem>>) -> (i32, i32, i32) {
    %c0_i32 = arith.constant 0 : i32
    %c0_i32_0 = arith.constant 0 : i32
    return %arg0, %arg1, %c0_i32 : i32, i32, i32
  }
  func.func @transform_1(%arg0: i32, %arg1: i32, %arg2: memref<2xi32, #tpu.memory_space<smem>>) -> (i32, i32, i32) {
    %c0_i32 = arith.constant 0 : i32
    %c0_i32_0 = arith.constant 0 : i32
    %c0_i32_1 = arith.constant 0 : i32
    return %arg0, %c0_i32, %c0_i32_0 : i32, i32, i32
  }
  func.func @transform_2(%arg0: i32, %arg1: i32, %arg2: memref<2xi32, #tpu.memory_space<smem>>) -> (i32, i32, i32) {
    %c0_i32 = arith.constant 0 : i32
    %c0_i32_0 = arith.constant 0 : i32
    %c0_i32_1 = arith.constant 0 : i32
    return %arg0, %c0_i32, %c0_i32_0 : i32, i32, i32
  }
  func.func @transform_3(%arg0: i32, %arg1: i32, %arg2: memref<2xi32, #tpu.memory_space<smem>>) -> (i32, i32) {
    %c0_i32 = arith.constant 0 : i32
    %c0_i32_0 = arith.constant 0 : i32
    %c0_i32_1 = arith.constant 0 : i32
    return %c0_i32, %c0_i32_0 : i32, i32
  }
  func.func @transform_4(%arg0: i32, %arg1: i32, %arg2: memref<2xi32, #tpu.memory_space<smem>>) -> (i32, i32) {
    %c0_i32 = arith.constant 0 : i32
    %c0_i32_0 = arith.constant 0 : i32
    %c0_i32_1 = arith.constant 0 : i32
    return %c0_i32, %c0_i32_0 : i32, i32
  }
  func.func @transform_5(%arg0: i32, %arg1: i32, %arg2: memref<2xi32, #tpu.memory_space<smem>>) -> (i32, i32) {
    %c0_i32 = arith.constant 0 : i32
    %c0_i32_0 = arith.constant 0 : i32
    %c0_i32_1 = arith.constant 0 : i32
    return %c0_i32, %c0_i32_0 : i32, i32
  }
  func.func @transform_6(%arg0: i32, %arg1: i32, %arg2: memref<2xi32, #tpu.memory_space<smem>>) -> (i32, i32) {
    %c0_i32 = arith.constant 0 : i32
    %c0_i32_0 = arith.constant 0 : i32
    %c0_i32_1 = arith.constant 0 : i32
    return %c0_i32, %c0_i32_0 : i32, i32
  }
  func.func @transform_7(%arg0: i32, %arg1: i32, %arg2: memref<2xi32, #tpu.memory_space<smem>>) -> (i32, i32, i32) {
    %c0_i32 = arith.constant 0 : i32
    %c0_i32_0 = arith.constant 0 : i32
    return %arg0, %arg1, %c0_i32 : i32, i32, i32
  }
}

</mosaic_0001>

<llo_original>
// kernel: tpu_custom_call.1
$region0: #{tpu_custom_call.1}
  #allocation0 [shape = 'u32[]', space=smem, size = 0x4, offset = 0x4, fixed_abs, tag = 'smem constant byte address 0x4 - core index']
  #allocation1 [shape = 'u32[144,128]{1,0:T(1,128)}', space=vmem, size = 0x12000, scoped, tag = 'internal scratch']
  #allocation2 [shape = 'bf16[8,128]{1,0:T(8,128)(2,1)}', space=vmem, size = 0x800, scoped, tag = 'scratch operand']
  #allocation3 [shape = 'bf16[8,128]{1,0:T(8,128)(2,1)}', space=vmem, size = 0x800, scoped, tag = 'scratch operand']
  #allocation4 [shape = 'f32[8,128]{1,0:T(8,128)}', space=vmem, size = 0x1000, scoped, tag = 'scratch operand']
  #allocation5 [shape = 's32[1]{0}', space=sflag, size = 0x4, scoped, tag = 'scoped memory for tpu_custom_call.1']
  #allocation6 [shape = 'u8[512]{0}', space=smem, size = 0x200, scoped, tag = 'prefetched SMEM operand 0']
  %s0 = inlined_call_operand.hbm [shape: s32[2], index: 0, kind: input, shape index: {}]
  %s1 = inlined_call_operand.hbm [shape: f32[2,8,64], index: 1, kind: input, shape index: {}]
  %s2 = inlined_call_operand.hbm [shape: f32[2,8,64], index: 2, kind: input, shape index: {}]
  %s3 = inlined_call_operand.hbm [shape: f32[2,8,64], index: 3, kind: input, shape index: {}]
  %s4 = inlined_call_operand.hbm [shape: bf16[64,128], index: 4, kind: input, shape index: {}]
  %s5 = inlined_call_operand.hbm [shape: bf16[64,128], index: 5, kind: input, shape index: {}]
  %s6 = inlined_call_operand.hbm [shape: bf16[64,128], index: 6, kind: input, shape index: {}]
  %s7 = inlined_call_operand.hbm [shape: bf16[128,128], index: 7, kind: input, shape index: {}]
  %s8 = inlined_call_operand.hbm [shape: f32[2,8,128], index: 8, kind: output, shape index: {}]
  %s9 = sld [smem:[#allocation0]]
  $region93: #{tpu_custom_call.1} parent=0
    _
  %s11 = ssub.s32 1, %s9
  %s12 = scalar_select 0, %s11, %s9
  %14 = dma.hbm_to_smem %s0, 16, [#allocation6], [#allocation5]
  %15 = dma.done [#allocation5], 16
  %16 = sfence
  $region1: #{tpu_custom_call.1} parent=0
    #allocation7 [shape = 'u8[8192]{0}', space=vmem, size = 0x2000, scoped, tag = 'input window, operand 1']
    #allocation8 [shape = 's32[2]{0}', space=sflag, size = 0x8, scoped, tag = 'scoped memory for tpu_custom_call.1']
    #allocation9 [shape = 's32[2]{0}', space=sflag, size = 0x8, scoped, tag = 'scoped memory for tpu_custom_call.1']
    #allocation10 [shape = 'u8[8192]{0}', space=vmem, size = 0x2000, scoped, tag = 'input window, operand 2']
    #allocation11 [shape = 's32[2]{0}', space=sflag, size = 0x8, scoped, tag = 'scoped memory for tpu_custom_call.1']
    #allocation12 [shape = 'u8[8192]{0}', space=vmem, size = 0x2000, scoped, tag = 'input window, operand 3']
    #allocation13 [shape = 'u8[16384]{0}', space=vmem, size = 0x4000, scoped, tag = 'input window, operand 4, single buffered']
    #allocation14 [shape = 's32[1]{0}', space=sflag, size = 0x4, scoped, tag = 'scoped memory for tpu_custom_call.1']
    #allocation15 [shape = 'u8[16384]{0}', space=vmem, size = 0x4000, scoped, tag = 'input window, operand 5, single buffered']
    #allocation16 [shape = 'u8[16384]{0}', space=vmem, size = 0x4000, scoped, tag = 'input window, operand 6, single buffered']
    #allocation17 [shape = 's32[1]{0}', space=sflag, size = 0x4, scoped, tag = 'scoped memory for tpu_custom_call.1']
    #allocation18 [shape = 'u8[32768]{0}', space=vmem, size = 0x8000, scoped, tag = 'input window, operand 7, single buffered']
    #allocation19 [shape = 'u8[8192]{0}', space=vmem, size = 0x2000, scoped, tag = 'output window, operand 0']
    %17 = vsyncpa [#allocation8], 0
    %s18 = scalar_lea.sflag [#allocation8], 1
    %19 = vsyncpa %s18, 0
    %20 = vsyncpa [#allocation11], 0
    %s21 = scalar_lea.sflag [#allocation11], 1
    %22 = vsyncpa %s21, 0
    %23 = vsyncpa [#allocation14], 0
    %24 = vsyncpa [#allocation17], 0
    %25 = vsyncpa [#allocation9], 0
    %s26 = scalar_lea.sflag [#allocation9], 1
    %27 = vsyncpa %s26, 0
    loop: start=0, step=1, limit=4
    $region2: #{tpu_custom_call.1} parent=1 // loop_pre_header
      _
    $region3: #{tpu_custom_call.1} parent=1 // loop_header
      %s29 = sphi 0, %s33
      %p30 = scmp.ge.s32.totalorder %s29, 4
      %s36 = sphi 0, %s48
      %s37 = sphi 0, %s44
      %s38 = sphi 0, %s36
      %s39 = sphi 0, %s37
      %s40 = sphi 0, %s38
      %s41 = sphi 0, %s39
      %s53 = sphi 0, %s55
      %s56 = sphi 0, %s53
      %s57 = sphi 0, %s56
      %s73 = sphi 0, %s57
      %s79 = sphi 0, %s81
      %s82 = sphi 0, %s79
      %s83 = sphi 0, %s82
      %s99 = sphi 0, %s83
      %s105 = sphi 0, %s107
      %s108 = sphi 0, %s105
      %s109 = sphi 0, %s108
      %s125 = sphi 0, %s109
      %s129 = sphi 0, %s129
      %s131 = sphi 0, %s129
      %s132 = sphi 0, %s131
      %s146 = sphi 0, %s132
      %s150 = sphi 0, %s150
      %s152 = sphi 0, %s150
      %s153 = sphi 0, %s152
      %s167 = sphi 0, %s153
      %s171 = sphi 0, %s171
      %s173 = sphi 0, %s171
      %s174 = sphi 0, %s173
      %s188 = sphi 0, %s174
      %s192 = sphi 0, %s192
      %s194 = sphi 0, %s192
      %s195 = sphi 0, %s194
      %s209 = sphi 0, %s195
      %s217 = sphi 0, %s219
      %s220 = sphi 0, %s217
      %s221 = sphi 0, %s220
      %s237 = sphi 0, %s221
    $region4: #{tpu_custom_call.1} parent=1 // loop_header_branch
      %32 = sbr.rel (%p30) target = $region8
    $region5: #{tpu_custom_call.1} parent=1 // loop_body
      %s34 = ssub.s32 %s29, 1
      %s35 = ssub.s32 %s29, 2
      %s42 = sadd.s32 1, %s37
      %p43 = scmp.ge.s32.totalorder %s42, 1
      %s44 = scalar_select %p43, 0, %s42
      %s45 = sadd.s32 1, %s36
      %s46 = scalar_select %p43, %s45, %s36
      %p47 = scmp.ge.s32.totalorder %s46, 2
      %s48 = scalar_select %p47, 0, %s46
      %s49 = ssub.s32 %s36, %s48
      %s50 = ssub.s32 %s37, %s44
      %s51 = sor.u32 %s49, %s50
      %p52 = scmp.eq.s32.totalorder %s51, 0
      %s54 = sadd.s32 %s53, 1
      %s55 = scalar_select %p52, %s53, %s54
      %p58 = pneg %p52
      %p59 = scmp.eq.s32.totalorder %s29, 1
      %p60 = por %p58, %p59
      %p61 = scmp.ne.s32.totalorder %s53, %s56
      %p62 = scmp.eq.s32.totalorder %s29, 0
      %p63 = por %p61, %p62
      %p64 = scmp.ne.s32.totalorder %s53, %s56
      %p65 = scmp.eq.s32.totalorder %s34, 1
      %p66 = por %p64, %p65
      %p67 = scmp.ne.s32.totalorder %s56, %s57
      %p68 = scmp.eq.s32.totalorder %s34, 0
      %p69 = por %p67, %p68
      %p70 = scmp.ne.s32.totalorder %s56, %s57
      %p71 = scmp.eq.s32.totalorder %s35, 1
      %p72 = por %p70, %p71
      %p74 = scmp.ne.s32.totalorder %s57, %s73
      %p75 = scmp.eq.s32.totalorder %s35, 0
      %p76 = por %p74, %p75
      %s77 = ssub.s32 %s36, %s48
      %p78 = scmp.eq.s32.totalorder %s77, 0
      %s80 = sadd.s32 %s79, 1
      %s81 = scalar_select %p78, %s79, %s80
      %p84 = pneg %p78
      %p85 = scmp.eq.s32.totalorder %s29, 1
      %p86 = por %p84, %p85
      %p87 = scmp.ne.s32.totalorder %s79, %s82
      %p88 = scmp.eq.s32.totalorder %s29, 0
      %p89 = por %p87, %p88
      %p90 = scmp.ne.s32.totalorder %s79, %s82
      %p91 = scmp.eq.s32.totalorder %s34, 1
      %p92 = por %p90, %p91
      %p93 = scmp.ne.s32.totalorder %s82, %s83
      %p94 = scmp.eq.s32.totalorder %s34, 0
      %p95 = por %p93, %p94
      %p96 = scmp.ne.s32.totalorder %s82, %s83
      %p97 = scmp.eq.s32.totalorder %s35, 1
      %p98 = por %p96, %p97
      %p100 = scmp.ne.s32.totalorder %s83, %s99
      %p101 = scmp.eq.s32.totalorder %s35, 0
      %p102 = por %p100, %p101
      %s103 = ssub.s32 %s36, %s48
      %p104 = scmp.eq.s32.totalorder %s103, 0
      %s106 = sadd.s32 %s105, 1
      %s107 = scalar_select %p104, %s105, %s106
      %p110 = pneg %p104
      %p111 = scmp.eq.s32.totalorder %s29, 1
      %p112 = por %p110, %p111
      %p113 = scmp.ne.s32.totalorder %s105, %s108
      %p114 = scmp.eq.s32.totalorder %s29, 0
      %p115 = por %p113, %p114
      %p116 = scmp.ne.s32.totalorder %s105, %s108
      %p117 = scmp.eq.s32.totalorder %s34, 1
      %p118 = por %p116, %p117
      %p119 = scmp.ne.s32.totalorder %s108, %s109
      %p120 = scmp.eq.s32.totalorder %s34, 0
      %p121 = por %p119, %p120
      %p122 = scmp.ne.s32.totalorder %s108, %s109
      %p123 = scmp.eq.s32.totalorder %s35, 1
      %p124 = por %p122, %p123
      %p126 = scmp.ne.s32.totalorder %s109, %s125
      %p127 = scmp.eq.s32.totalorder %s35, 0
      %p128 = por %p126, %p127
      %s130 = sadd.s32 %s129, 1
      %p133 = scmp.eq.s32.totalorder %s29, 1
      %p134 = scmp.ne.s32.totalorder %s129, %s131
      %p135 = scmp.eq.s32.totalorder %s29, 0
      %p136 = por %p134, %p135
      %p137 = scmp.ne.s32.totalorder %s129, %s131
      %p138 = scmp.eq.s32.totalorder %s34, 1
      %p139 = por %p137, %p138
      %p140 = scmp.ne.s32.totalorder %s131, %s132
      %p141 = scmp.eq.s32.totalorder %s34, 0
      %p142 = por %p140, %p141
      %p143 = scmp.ne.s32.totalorder %s131, %s132
      %p144 = scmp.eq.s32.totalorder %s35, 1
      %p145 = por %p143, %p144
      %p147 = scmp.ne.s32.totalorder %s132, %s146
      %p148 = scmp.eq.s32.totalorder %s35, 0
      %p149 = por %p147, %p148
      %s151 = sadd.s32 %s150, 1
      %p154 = scmp.eq.s32.totalorder %s29, 1
      %p155 = scmp.ne.s32.totalorder %s150, %s152
      %p156 = scmp.eq.s32.totalorder %s29, 0
      %p157 = por %p155, %p156
      %p158 = scmp.ne.s32.totalorder %s150, %s152
      %p159 = scmp.eq.s32.totalorder %s34, 1
      %p160 = por %p158, %p159
      %p161 = scmp.ne.s32.totalorder %s152, %s153
      %p162 = scmp.eq.s32.totalorder %s34, 0
      %p163 = por %p161, %p162
      %p164 = scmp.ne.s32.totalorder %s152, %s153
      %p165 = scmp.eq.s32.totalorder %s35, 1
      %p166 = por %p164, %p165
      %p168 = scmp.ne.s32.totalorder %s153, %s167
      %p169 = scmp.eq.s32.totalorder %s35, 0
      %p170 = por %p168, %p169
      %s172 = sadd.s32 %s171, 1
      %p175 = scmp.eq.s32.totalorder %s29, 1
      %p176 = scmp.ne.s32.totalorder %s171, %s173
      %p177 = scmp.eq.s32.totalorder %s29, 0
      %p178 = por %p176, %p177
      %p179 = scmp.ne.s32.totalorder %s171, %s173
      %p180 = scmp.eq.s32.totalorder %s34, 1
      %p181 = por %p179, %p180
      %p182 = scmp.ne.s32.totalorder %s173, %s174
      %p183 = scmp.eq.s32.totalorder %s34, 0
      %p184 = por %p182, %p183
      %p185 = scmp.ne.s32.totalorder %s173, %s174
      %p186 = scmp.eq.s32.totalorder %s35, 1
      %p187 = por %p185, %p186
      %p189 = scmp.ne.s32.totalorder %s174, %s188
      %p190 = scmp.eq.s32.totalorder %s35, 0
      %p191 = por %p189, %p190
      %s193 = sadd.s32 %s192, 1
      %p196 = scmp.eq.s32.totalorder %s29, 1
      %p197 = scmp.ne.s32.totalorder %s192, %s194
      %p198 = scmp.eq.s32.totalorder %s29, 0
      %p199 = por %p197, %p198
      %p200 = scmp.ne.s32.totalorder %s192, %s194
      %p201 = scmp.eq.s32.totalorder %s34, 1
      %p202 = por %p200, %p201
      %p203 = scmp.ne.s32.totalorder %s194, %s195
      %p204 = scmp.eq.s32.totalorder %s34, 0
      %p205 = por %p203, %p204
      %p206 = scmp.ne.s32.totalorder %s194, %s195
      %p207 = scmp.eq.s32.totalorder %s35, 1
      %p208 = por %p206, %p207
      %p210 = scmp.ne.s32.totalorder %s195, %s209
      %p211 = scmp.eq.s32.totalorder %s35, 0
      %p212 = por %p210, %p211
      %s213 = ssub.s32 %s36, %s48
      %s214 = ssub.s32 %s37, %s44
      %s215 = sor.u32 %s213, %s214
      %p216 = scmp.eq.s32.totalorder %s215, 0
      %s218 = sadd.s32 %s217, 1
      %s219 = scalar_select %p216, %s217, %s218
      %p222 = pneg %p216
      %p223 = scmp.eq.s32.totalorder %s29, 1
      %p224 = por %p222, %p223
      %p225 = scmp.ne.s32.totalorder %s217, %s220
      %p226 = scmp.eq.s32.totalorder %s29, 0
      %p227 = por %p225, %p226
      %p228 = scmp.ne.s32.totalorder %s217, %s220
      %p229 = scmp.eq.s32.totalorder %s34, 1
      %p230 = por %p228, %p229
      %p231 = scmp.ne.s32.totalorder %s220, %s221
      %p232 = scmp.eq.s32.totalorder %s34, 0
      %p233 = por %p231, %p232
      %p234 = scmp.ne.s32.totalorder %s220, %s221
      %p235 = scmp.eq.s32.totalorder %s35, 1
      %p236 = por %p234, %p235
      %p238 = scmp.ne.s32.totalorder %s221, %s237
      %p239 = scmp.eq.s32.totalorder %s35, 0
      %p240 = por %p238, %p239
      %p241 = scmp.le.s32.totalorder 1, %s29
      %p242 = scmp.lt.s32.totalorder %s29, 3
      %p243 = pnand %p241, %p242
      %p244 = pneg %p243
      // Predicated region
      $region9: #{tpu_custom_call.1} parent=5 // pred_check
        _
      $region10: #{tpu_custom_call.1} parent=5 // pred_check_branch
        %246 = sbr.rel (%p243) target = $region12
      $region11: #{tpu_custom_call.1} parent=5 // pred_region
        %s247 = ssub.s32 %s29, 1
        // Predicated region
        $region13: #{tpu_custom_call.1} parent=11 // pred_check
          %p248 = pneg %p142
        $region14: #{tpu_custom_call.1} parent=11 // pred_check_branch
          %250 = sbr.rel (%p248) target = $region16
        $region15: #{tpu_custom_call.1} parent=11 // pred_region
          %s252 = ssub.s32 512, 512
          %253 = vsyncadd [#allocation14], %s252
          %s254 = sshll.u32 [#allocation13], 4
          %s255 = int_to_ptr.vmem [resolvable:$true] %s254
          %260 = dma.hbm_to_vmem [thread:$0]  %s4, 512, %s255, [#allocation14], 64, 64, 4
        $region16: #{tpu_custom_call.1} parent=11 // pred_fallthru
          _
        // Predicated region
        $region17: #{tpu_custom_call.1} parent=11 // pred_check
          %p261 = pneg %p163
        $region18: #{tpu_custom_call.1} parent=11 // pred_check_branch
          %263 = sbr.rel (%p261) target = $region20
        $region19: #{tpu_custom_call.1} parent=11 // pred_region
          %s265 = ssub.s32 512, 512
          %266 = vsyncadd [#allocation14], %s265
          %s267 = sshll.u32 [#allocation15], 4
          %s268 = int_to_ptr.vmem [resolvable:$true] %s267
          %273 = dma.hbm_to_vmem [thread:$0]  %s5, 512, %s268, [#allocation14], 64, 64, 4
        $region20: #{tpu_custom_call.1} parent=11 // pred_fallthru
          _
        // Predicated region
        $region21: #{tpu_custom_call.1} parent=11 // pred_check
          %p274 = pneg %p184
        $region22: #{tpu_custom_call.1} parent=11 // pred_check_branch
          %276 = sbr.rel (%p274) target = $region24
        $region23: #{tpu_custom_call.1} parent=11 // pred_region
          %s278 = ssub.s32 512, 512
          %279 = vsyncadd [#allocation17], %s278
          %s280 = sshll.u32 [#allocation16], 4
          %s281 = int_to_ptr.vmem [resolvable:$true] %s280
          %286 = dma.hbm_to_vmem [thread:$0]  %s6, 512, %s281, [#allocation17], 64, 64, 4
        $region24: #{tpu_custom_call.1} parent=11 // pred_fallthru
          _
        // Predicated region
        $region25: #{tpu_custom_call.1} parent=11 // pred_check
          %p287 = pneg %p205
        $region26: #{tpu_custom_call.1} parent=11 // pred_check_branch
          %289 = sbr.rel (%p287) target = $region28
        $region27: #{tpu_custom_call.1} parent=11 // pred_region
          %s291 = ssub.s32 1024, 1024
          %292 = vsyncadd [#allocation17], %s291
          %s293 = sshll.u32 [#allocation18], 4
          %s294 = int_to_ptr.vmem [resolvable:$true] %s293
          %299 = dma.hbm_to_vmem [thread:$0]  %s7, 1024, %s294, [#allocation17], 64, 64, 4
        $region28: #{tpu_custom_call.1} parent=11 // pred_fallthru
          _
      $region12: #{tpu_custom_call.1} parent=5 // pred_fallthru
        _
      %p300 = scmp.lt.s32.totalorder %s29, 2
      // Predicated region
      $region29: #{tpu_custom_call.1} parent=5 // pred_check
        %p301 = pneg %p300
      $region30: #{tpu_custom_call.1} parent=5 // pred_check_branch
        %303 = sbr.rel (%p301) target = $region32
      $region31: #{tpu_custom_call.1} parent=5 // pred_region
        // Predicated region
        $region33: #{tpu_custom_call.1} parent=31 // pred_check
          %p304 = pneg %p63
        $region34: #{tpu_custom_call.1} parent=31 // pred_check_branch
          %306 = sbr.rel (%p304) target = $region36
        $region35: #{tpu_custom_call.1} parent=31 // pred_region
          %s307 = sand.u32 %s53, 1
          %s308 = scalar_lea.sflag [#allocation8], %s307
          %s309 = sand.u32 %s53, 1
          %s310 = smul.addr %s309, 8
          %s311 = scalar_lea.vmem [#allocation7], %s310
          %s313 = ssub.s32 128, 128
          %314 = vsyncadd %s308, %s313
          %s315 = sadd.s32 %s37, %s36
          %s316 = smul.addr %s315, 128
          %s317 = scalar_lea.hbm %s1, %s316
          %s319 = sshll.u32 %s311, 4
          %s320 = int_to_ptr.vmem [resolvable:$true] %s319
          %322 = dma.hbm_to_vmem [thread:$0]  %s317, 128, %s320, %s308
        $region36: #{tpu_custom_call.1} parent=31 // pred_fallthru
          _
        // Predicated region
        $region37: #{tpu_custom_call.1} parent=31 // pred_check
          %p323 = pneg %p89
        $region38: #{tpu_custom_call.1} parent=31 // pred_check_branch
          %325 = sbr.rel (%p323) target = $region40
        $region39: #{tpu_custom_call.1} parent=31 // pred_region
          %s326 = sand.u32 %s29, 1
          %s327 = scalar_lea.sflag [#allocation11], %s326
          %s328 = sand.u32 %s79, 1
          %s329 = smul.addr %s328, 8
          %s330 = scalar_lea.vmem [#allocation10], %s329
          %s332 = ssub.s32 128, 128
          %333 = vsyncadd %s327, %s332
          %s334 = smul.addr %s36, 128
          %s335 = scalar_lea.hbm %s2, %s334
          %s337 = sshll.u32 %s330, 4
          %s338 = int_to_ptr.vmem [resolvable:$true] %s337
          %340 = dma.hbm_to_vmem [thread:$0]  %s335, 128, %s338, %s327
        $region40: #{tpu_custom_call.1} parent=31 // pred_fallthru
          _
        // Predicated region
        $region41: #{tpu_custom_call.1} parent=31 // pred_check
          %p341 = pneg %p115
        $region42: #{tpu_custom_call.1} parent=31 // pred_check_branch
          %343 = sbr.rel (%p341) target = $region44
        $region43: #{tpu_custom_call.1} parent=31 // pred_region
          %s344 = sand.u32 %s29, 1
          %s345 = scalar_lea.sflag [#allocation11], %s344
          %s346 = sand.u32 %s105, 1
          %s347 = smul.addr %s346, 8
          %s348 = scalar_lea.vmem [#allocation12], %s347
          %s350 = ssub.s32 128, 128
          %351 = vsyncadd %s345, %s350
          %s352 = smul.addr %s36, 128
          %s353 = scalar_lea.hbm %s3, %s352
          %s355 = sshll.u32 %s348, 4
          %s356 = int_to_ptr.vmem [resolvable:$true] %s355
          %358 = dma.hbm_to_vmem [thread:$0]  %s353, 128, %s356, %s345
        $region44: #{tpu_custom_call.1} parent=31 // pred_fallthru
          _
      $region32: #{tpu_custom_call.1} parent=5 // pred_fallthru
        _
      %p359 = scmp.le.s32.totalorder 1, %s29
      %p360 = scmp.lt.s32.totalorder %s29, 3
      %p361 = pnand %p359, %p360
      %p362 = pneg %p361
      // Predicated region
      $region45: #{tpu_custom_call.1} parent=5 // pred_check
        _
      $region46: #{tpu_custom_call.1} parent=5 // pred_check_branch
        %364 = sbr.rel (%p361) target = $region48
      $region47: #{tpu_custom_call.1} parent=5 // pred_region
        %s365 = ssub.s32 %s29, 1
        %s366 = sand.u32 %s56, 1
        %s367 = scalar_lea.sflag [#allocation8], %s366
        %s368 = sand.u32 %s56, 1
        %s369 = smul.addr %s368, 8
        %s370 = scalar_lea.vmem [#allocation7], %s369
        // Predicated region
        $region49: #{tpu_custom_call.1} parent=47 // pred_check
          %p371 = pneg %p69
        $region50: #{tpu_custom_call.1} parent=47 // pred_check_branch
          %373 = sbr.rel (%p371) target = $region52
        $region51: #{tpu_custom_call.1} parent=47 // pred_region
          %374 = dma.done %s367, 128
        $region52: #{tpu_custom_call.1} parent=47 // pred_fallthru
          _
        %s375 = sand.u32 %s34, 1
        %s376 = scalar_lea.sflag [#allocation11], %s375
        %s377 = sand.u32 %s82, 1
        %s378 = smul.addr %s377, 8
        %s379 = scalar_lea.vmem [#allocation10], %s378
        // Predicated region
        $region53: #{tpu_custom_call.1} parent=47 // pred_check
          %p380 = pneg %p95
        $region54: #{tpu_custom_call.1} parent=47 // pred_check_branch
          %382 = sbr.rel (%p380) target = $region56
        $region55: #{tpu_custom_call.1} parent=47 // pred_region
          %383 = dma.done %s376, 128
        $region56: #{tpu_custom_call.1} parent=47 // pred_fallthru
          _
        %s384 = sand.u32 %s34, 1
        %s385 = scalar_lea.sflag [#allocation11], %s384
        %s386 = sand.u32 %s108, 1
        %s387 = smul.addr %s386, 8
        %s388 = scalar_lea.vmem [#allocation12], %s387
        // Predicated region
        $region57: #{tpu_custom_call.1} parent=47 // pred_check
          %p389 = pneg %p121
        $region58: #{tpu_custom_call.1} parent=47 // pred_check_branch
          %391 = sbr.rel (%p389) target = $region60
        $region59: #{tpu_custom_call.1} parent=47 // pred_region
          %392 = dma.done %s385, 128
        $region60: #{tpu_custom_call.1} parent=47 // pred_fallthru
          _
        // Predicated region
        $region61: #{tpu_custom_call.1} parent=47 // pred_check
          %p393 = pneg %p142
        $region62: #{tpu_custom_call.1} parent=47 // pred_check_branch
          %395 = sbr.rel (%p393) target = $region64
        $region63: #{tpu_custom_call.1} parent=47 // pred_region
          %396 = dma.done [#allocation14], 512
        $region64: #{tpu_custom_call.1} parent=47 // pred_fallthru
          _
        // Predicated region
        $region65: #{tpu_custom_call.1} parent=47 // pred_check
          %p397 = pneg %p163
        $region66: #{tpu_custom_call.1} parent=47 // pred_check_branch
          %399 = sbr.rel (%p397) target = $region68
        $region67: #{tpu_custom_call.1} parent=47 // pred_region
          %400 = dma.done [#allocation14], 512
        $region68: #{tpu_custom_call.1} parent=47 // pred_fallthru
          _
        // Predicated region
        $region69: #{tpu_custom_call.1} parent=47 // pred_check
          %p401 = pneg %p184
        $region70: #{tpu_custom_call.1} parent=47 // pred_check_branch
          %403 = sbr.rel (%p401) target = $region72
        $region71: #{tpu_custom_call.1} parent=47 // pred_region
          %404 = dma.done [#allocation17], 512
        $region72: #{tpu_custom_call.1} parent=47 // pred_fallthru
          _
        // Predicated region
        $region73: #{tpu_custom_call.1} parent=47 // pred_check
          %p405 = pneg %p205
        $region74: #{tpu_custom_call.1} parent=47 // pred_check_branch
          %407 = sbr.rel (%p405) target = $region76
        $region75: #{tpu_custom_call.1} parent=47 // pred_region
          %408 = dma.done [#allocation17], 1024
        $region76: #{tpu_custom_call.1} parent=47 // pred_fallthru
          _
        %s409 = sand.u32 %s56, 1
        %s410 = scalar_lea.sflag [#allocation8], %s409
        %s411 = sand.u32 %s56, 1
        %s412 = smul.addr %s411, 8
        %s413 = scalar_lea.vmem [#allocation7], %s412
        %p414 = pneg %p69
        %p415 = pneg %p66
        %s416 = sand.u32 %s34, 1
        %s417 = scalar_lea.sflag [#allocation11], %s416
        %s418 = sand.u32 %s82, 1
        %s419 = smul.addr %s418, 8
        %s420 = scalar_lea.vmem [#allocation10], %s419
        %p421 = pneg %p95
        %p422 = pneg %p92
        %s423 = sand.u32 %s34, 1
        %s424 = scalar_lea.sflag [#allocation11], %s423
        %s425 = sand.u32 %s108, 1
        %s426 = smul.addr %s425, 8
        %s427 = scalar_lea.vmem [#allocation12], %s426
        %p428 = pneg %p121
        %p429 = pneg %p118
        %p430 = pneg %p142
        %p431 = pneg %p139
        %p432 = pneg %p163
        %p433 = pneg %p160
        %p434 = pneg %p184
        %p435 = pneg %p181
        %p436 = pneg %p205
        %p437 = pneg %p202
        %p438 = pneg %p233
        %p439 = pneg %p230
        %s440 = sand.u32 %s220, 1
        %s441 = scalar_lea.sflag [#allocation9], %s440
        %s442 = sand.u32 %s220, 1
        %s443 = smul.addr %s442, 8
        %s444 = scalar_lea.vmem [#allocation19], %s443
        %p446 = scmp.eq.s32.totalorder %s39, 0
        // Predicated region
        $region77: #{tpu_custom_call.1} parent=47 // pred_check
          %p447 = pneg %p446
        $region78: #{tpu_custom_call.1} parent=47 // pred_check_branch
          %449 = sbr.rel (%p447) target = $region80
        $region79: #{tpu_custom_call.1} parent=47 // pred_region
          %v450 = vld [vmem:[%s379] sm:$0xff]
          %v451 = vpack.c.bf16 %v450, %v450
          %v452 = vld [vmem:[#allocation15] sm:$0xf]
          %v453 = vld [vmem:[#allocation15 + $0x4] sm:$0xf]
          %v454 = vld [vmem:[#allocation15 + $0x8] sm:$0xf]
          %v455 = vld [vmem:[#allocation15 + $0xc] sm:$0xf]
          %v456 = vld [vmem:[#allocation15 + $0x10] sm:$0xf]
          %v457 = vld [vmem:[#allocation15 + $0x14] sm:$0xf]
          %v458 = vld [vmem:[#allocation15 + $0x18] sm:$0xf]
          %v459 = vld [vmem:[#allocation15 + $0x1c] sm:$0xf]
          %v468 = vunpack.c.l.b16 %v452
          %v469 = vunpack.c.l.b16 %v453
          %v470 = vunpack.c.l.b16 %v454
          %v471 = vunpack.c.l.b16 %v455
          %v472 = vunpack.c.l.b16 %v456
          %v473 = vunpack.c.l.b16 %v457
          %v474 = vunpack.c.l.b16 %v458
          %v475 = vunpack.c.l.b16 %v459
          %v476 = vpack.c.b16 %v469, %v468
          %v477 = vpack.c.b16 %v471, %v470
          %v478 = vpack.c.b16 %v473, %v472
          %v479 = vpack.c.b16 %v475, %v474
          %vm484 = vcmask 523264
          %v486 = vsel %vm484, %v451, 0
          %488 = vmatprep.subr.bf16.mxu0 0
          %489 = vmatpush1.bf16.msra.mxu0 %v476
          %490 = vmatprep.subr.bf16.mxu0 0
          %491 = vmatpush1.bf16.msra.mxu0 %v477
          %492 = vmatprep.subr.bf16.mxu0 0
          %493 = vmatpush1.bf16.msra.mxu0 %v478
          %494 = vmatprep.subr.bf16.mxu0 0
          %495 = vmatpush1.bf16.msra.mxu0 %v479
          %496 = vmatprep.subr.bf16.mxu0 0
          %497 = vmatpush1.bf16.msra.mxu0 0
          %498 = vmatprep.subr.bf16.mxu0 0
          %499 = vmatpush1.bf16.msra.mxu0 0
          %500 = vmatprep.subr.bf16.mxu0 0
          %501 = vmatpush1.bf16.msra.mxu0 0
          %502 = vmatprep.subr.bf16.mxu0 0
          %503 = vmatpush1.bf16.msra.mxu0 0
          %504 = vmatprep.subr.bf16.mxu0 0
          %505 = vmatpush1.bf16.msra.mxu0 0
          %506 = vmatprep.subr.bf16.mxu0 0
          %507 = vmatpush1.bf16.msra.mxu0 0
          %508 = vmatprep.subr.bf16.mxu0 0
          %509 = vmatpush1.bf16.msra.mxu0 0
          %510 = vmatprep.subr.bf16.mxu0 0
          %511 = vmatpush1.bf16.msra.mxu0 0
          %512 = vmatprep.subr.bf16.mxu0 0
          %513 = vmatpush1.bf16.msra.mxu0 0
          %514 = vmatprep.subr.bf16.mxu0 0
          %515 = vmatpush1.bf16.msra.mxu0 0
          %516 = vmatprep.subr.bf16.mxu0 0
          %517 = vmatpush1.bf16.msra.mxu0 0
          %518 = vmatprep.subr.bf16.mxu0 0
          %519 = vmatpush1.bf16.msra.mxu0 0
          %520 = vmatprep.mubr.bf16.mxu0 0
          %521 = vmatmul.mubr.bf16.gmra.mrb[0].mxu0 %v486
          %v522 = vpop.f32.mrb[0].mxu0
          %v523 = vadd.f32 0.0, %v522
          %v524 = vpop.f32.mrb[0].mxu0
          %v525 = vpop.f32.mrb[0].mxu0
          %v526 = vpop.f32.mrb[0].mxu0
          %527 = vdwg.mxu0
          %v528 = vpack.c.bf16 %v523, %v523
          %529 = vst [vmem:[#allocation2] sm:$0xf] %v528
          %v530 = vld [vmem:[%s388] sm:$0xff]
          %v531 = vpack.c.bf16 %v530, %v530
          %v532 = vld [vmem:[#allocation16] sm:$0xf]
          %v533 = vld [vmem:[#allocation16 + $0x4] sm:$0xf]
          %v534 = vld [vmem:[#allocation16 + $0x8] sm:$0xf]
          %v535 = vld [vmem:[#allocation16 + $0xc] sm:$0xf]
          %v536 = vld [vmem:[#allocation16 + $0x10] sm:$0xf]
          %v537 = vld [vmem:[#allocation16 + $0x14] sm:$0xf]
          %v538 = vld [vmem:[#allocation16 + $0x18] sm:$0xf]
          %v539 = vld [vmem:[#allocation16 + $0x1c] sm:$0xf]
          %v548 = vunpack.c.l.b16 %v532
          %v549 = vunpack.c.l.b16 %v533
          %v550 = vunpack.c.l.b16 %v534
          %v551 = vunpack.c.l.b16 %v535
          %v552 = vunpack.c.l.b16 %v536
          %v553 = vunpack.c.l.b16 %v537
          %v554 = vunpack.c.l.b16 %v538
          %v555 = vunpack.c.l.b16 %v539
          %v556 = vpack.c.b16 %v549, %v548
          %v557 = vpack.c.b16 %v551, %v550
          %v558 = vpack.c.b16 %v553, %v552
          %v559 = vpack.c.b16 %v555, %v554
          %v565 = vsel %vm484, %v531, 0
          %567 = vmatprep.subr.bf16.mxu0 0
          %568 = vmatpush1.bf16.msra.mxu0 %v556
          %569 = vmatprep.subr.bf16.mxu0 0
          %570 = vmatpush1.bf16.msra.mxu0 %v557
          %571 = vmatprep.subr.bf16.mxu0 0
          %572 = vmatpush1.bf16.msra.mxu0 %v558
          %573 = vmatprep.subr.bf16.mxu0 0
          %574 = vmatpush1.bf16.msra.mxu0 %v559
          %575 = vmatprep.subr.bf16.mxu0 0
          %576 = vmatpush1.bf16.msra.mxu0 0
          %577 = vmatprep.subr.bf16.mxu0 0
          %578 = vmatpush1.bf16.msra.mxu0 0
          %579 = vmatprep.subr.bf16.mxu0 0
          %580 = vmatpush1.bf16.msra.mxu0 0
          %581 = vmatprep.subr.bf16.mxu0 0
          %582 = vmatpush1.bf16.msra.mxu0 0
          %583 = vmatprep.subr.bf16.mxu0 0
          %584 = vmatpush1.bf16.msra.mxu0 0
          %585 = vmatprep.subr.bf16.mxu0 0
          %586 = vmatpush1.bf16.msra.mxu0 0
          %587 = vmatprep.subr.bf16.mxu0 0
          %588 = vmatpush1.bf16.msra.mxu0 0
          %589 = vmatprep.subr.bf16.mxu0 0
          %590 = vmatpush1.bf16.msra.mxu0 0
          %591 = vmatprep.subr.bf16.mxu0 0
          %592 = vmatpush1.bf16.msra.mxu0 0
          %593 = vmatprep.subr.bf16.mxu0 0
          %594 = vmatpush1.bf16.msra.mxu0 0
          %595 = vmatprep.subr.bf16.mxu0 0
          %596 = vmatpush1.bf16.msra.mxu0 0
          %597 = vmatprep.subr.bf16.mxu0 0
          %598 = vmatpush1.bf16.msra.mxu0 0
          %599 = vmatprep.mubr.bf16.mxu0 0
          %600 = vmatmul.mubr.bf16.gmra.mrb[0].mxu0 %v565
          %v601 = vpop.f32.mrb[0].mxu0
          %v602 = vadd.f32 0.0, %v601
          %v603 = vpop.f32.mrb[0].mxu0
          %v604 = vpop.f32.mrb[0].mxu0
          %v605 = vpop.f32.mrb[0].mxu0
          %606 = vdwg.mxu0
          %v607 = vpack.c.bf16 %v602, %v602
          %608 = vst [vmem:[#allocation3] sm:$0xf] %v607
        $region80: #{tpu_custom_call.1} parent=47 // pred_fallthru
          _
        %v609 = vld [vmem:[%s370] sm:$0xff]
        %v610 = vpack.c.bf16 %v609, %v609
        %v611 = vld [vmem:[#allocation13] sm:$0xf]
        %v612 = vld [vmem:[#allocation13 + $0x4] sm:$0xf]
        %v613 = vld [vmem:[#allocation13 + $0x8] sm:$0xf]
        %v614 = vld [vmem:[#allocation13 + $0xc] sm:$0xf]
        %v615 = vld [vmem:[#allocation13 + $0x10] sm:$0xf]
        %v616 = vld [vmem:[#allocation13 + $0x14] sm:$0xf]
        %v617 = vld [vmem:[#allocation13 + $0x18] sm:$0xf]
        %v618 = vld [vmem:[#allocation13 + $0x1c] sm:$0xf]
        %v627 = vunpack.c.l.b16 %v611
        %v628 = vunpack.c.l.b16 %v612
        %v629 = vunpack.c.l.b16 %v613
        %v630 = vunpack.c.l.b16 %v614
        %v631 = vunpack.c.l.b16 %v615
        %v632 = vunpack.c.l.b16 %v616
        %v633 = vunpack.c.l.b16 %v617
        %v634 = vunpack.c.l.b16 %v618
        %v635 = vpack.c.b16 %v628, %v627
        %v636 = vpack.c.b16 %v630, %v629
        %v637 = vpack.c.b16 %v632, %v631
        %v638 = vpack.c.b16 %v634, %v633
        %vm643 = vcmask 523264
        %v645 = vsel %vm643, %v610, 0
        %647 = vmatprep.subr.bf16.mxu0 0
        %648 = vmatpush1.bf16.msra.mxu0 %v635
        %649 = vmatprep.subr.bf16.mxu0 0
        %650 = vmatpush1.bf16.msra.mxu0 %v636
        %651 = vmatprep.subr.bf16.mxu0 0
        %652 = vmatpush1.bf16.msra.mxu0 %v637
        %653 = vmatprep.subr.bf16.mxu0 0
        %654 = vmatpush1.bf16.msra.mxu0 %v638
        %655 = vmatprep.subr.bf16.mxu0 0
        %656 = vmatpush1.bf16.msra.mxu0 0
        %657 = vmatprep.subr.bf16.mxu0 0
        %658 = vmatpush1.bf16.msra.mxu0 0
        %659 = vmatprep.subr.bf16.mxu0 0
        %660 = vmatpush1.bf16.msra.mxu0 0
        %661 = vmatprep.subr.bf16.mxu0 0
        %662 = vmatpush1.bf16.msra.mxu0 0
        %663 = vmatprep.subr.bf16.mxu0 0
        %664 = vmatpush1.bf16.msra.mxu0 0
        %665 = vmatprep.subr.bf16.mxu0 0
        %666 = vmatpush1.bf16.msra.mxu0 0
        %667 = vmatprep.subr.bf16.mxu0 0
        %668 = vmatpush1.bf16.msra.mxu0 0
        %669 = vmatprep.subr.bf16.mxu0 0
        %670 = vmatpush1.bf16.msra.mxu0 0
        %671 = vmatprep.subr.bf16.mxu0 0
        %672 = vmatpush1.bf16.msra.mxu0 0
        %673 = vmatprep.subr.bf16.mxu0 0
        %674 = vmatpush1.bf16.msra.mxu0 0
        %675 = vmatprep.subr.bf16.mxu0 0
        %676 = vmatpush1.bf16.msra.mxu0 0
        %677 = vmatprep.subr.bf16.mxu0 0
        %678 = vmatpush1.bf16.msra.mxu0 0
        %679 = vmatprep.mubr.bf16.mxu0 0
        %680 = vmatmul.mubr.bf16.gmra.mrb[0].mxu0 %v645
        %v681 = vpop.f32.mrb[0].mxu0
        %v682 = vadd.f32 0.0, %v681
        %v683 = vpop.f32.mrb[0].mxu0
        %v684 = vpop.f32.mrb[0].mxu0
        %v685 = vpop.f32.mrb[0].mxu0
        %686 = vdwg.mxu0
        %v687 = vmul.f32 %v682, 0.17677669
        %v688 = vpack.c.bf16 %v687, %v687
        %v689 = vld [vmem:[#allocation2] sm:$0xf]
        %v690 = vld [vmem:[#allocation3] sm:$0xf]
        %s691 = sld [smem:[#allocation6 + %s38]]
        %v692 = vlaneseq
        %v693 = vand.u32 %v692, 127
        %v694 = vstv %s691
        %vm695 = vcmp.lt.s32.totalorder %v693, %v694
        %v696 = vsel %vm695, 0.0, -1000000.0
        %vm697 = vcmask 261120
        %v699 = vsel %vm697, %v688, 0
        %v702 = vsel %vm697, %v689, 0
        %704 = vmatprep.subr.bf16.mxu0 0
        %705 = vmatpush1.bf16.xpose.msra.mxu0 %v702
        %706 = vmatprep.subr.bf16.mxu0 0
        %707 = vmatpush1.bf16.xpose.msra.mxu0 0
        %708 = vmatprep.subr.bf16.mxu0 0
        %709 = vmatpush1.bf16.xpose.msra.mxu0 0
        %710 = vmatprep.subr.bf16.mxu0 0
        %711 = vmatpush1.bf16.xpose.msra.mxu0 0
        %712 = vmatprep.subr.bf16.mxu0 0
        %713 = vmatpush1.bf16.xpose.msra.mxu0 0
        %714 = vmatprep.subr.bf16.mxu0 0
        %715 = vmatpush1.bf16.xpose.msra.mxu0 0
        %716 = vmatprep.subr.bf16.mxu0 0
        %717 = vmatpush1.bf16.xpose.msra.mxu0 0
        %718 = vmatprep.subr.bf16.mxu0 0
        %719 = vmatpush1.bf16.xpose.msra.mxu0 0
        %720 = vmatprep.subr.bf16.mxu0 0
        %721 = vmatpush1.bf16.xpose.msra.mxu0 0
        %722 = vmatprep.subr.bf16.mxu0 0
        %723 = vmatpush1.bf16.xpose.msra.mxu0 0
        %724 = vmatprep.subr.bf16.mxu0 0
        %725 = vmatpush1.bf16.xpose.msra.mxu0 0
        %726 = vmatprep.subr.bf16.mxu0 0
        %727 = vmatpush1.bf16.xpose.msra.mxu0 0
        %728 = vmatprep.subr.bf16.mxu0 0
        %729 = vmatpush1.bf16.xpose.msra.mxu0 0
        %730 = vmatprep.subr.bf16.mxu0 0
        %731 = vmatpush1.bf16.xpose.msra.mxu0 0
        %732 = vmatprep.subr.bf16.mxu0 0
        %733 = vmatpush1.bf16.xpose.msra.mxu0 0
        %734 = vmatprep.subr.bf16.mxu0 0
        %735 = vmatpush1.bf16.xpose.msra.mxu0 0
        %736 = vmatprep.mubr.bf16.mxu0 0
        %737 = vmatmul.mubr.bf16.gmra.mrb[0].mxu0 %v699
        %v738 = vpop.f32.mrb[0].mxu0
        %v739 = vadd.f32 %v696, %v738
        %v740 = vpop.f32.mrb[0].mxu0
        %v741 = vpop.f32.mrb[0].mxu0
        %v742 = vpop.f32.mrb[0].mxu0
        %743 = vdwg.mxu0
        %vm744 = vcmask 64512
        %v745 = vsel %vm744, %v739, -inf
        %746 = vmax.xlane.f32.xlu0 %v745
        %v747 = vpop.xlane.xlu0 %746
        %v748 = vsub.f32 %v739, %v747
        %v749 = vmul.f32 %v748, 1.442695
        %v750 = vpow.pop %v749
        %v751 = vsel %vm744, %v750, 0.0
        %752 = vadd.xlane.f32.xlu0 %v751
        %v753 = vpop.xlane.xlu0 %752
        %v754 = vrcp.pop %v753
        %v755 = vmul.f32 %v750, %v754
        %v756 = vpack.c.bf16 %v755, %v755
        %v758 = vsel %vm744, %v756, 0
        %vm760 = vcmask 1043456
        %v762 = vsel %vm760, %v690, 0
        %764 = vmatprep.subr.bf16.mxu0 0
        %765 = vmatpush1.bf16.msra.mxu0 %v762
        %766 = vmatprep.subr.bf16.mxu0 0
        %767 = vmatpush1.bf16.msra.mxu0 0
        %768 = vmatprep.subr.bf16.mxu0 0
        %769 = vmatpush1.bf16.msra.mxu0 0
        %770 = vmatprep.subr.bf16.mxu0 0
        %771 = vmatpush1.bf16.msra.mxu0 0
        %772 = vmatprep.subr.bf16.mxu0 0
        %773 = vmatpush1.bf16.msra.mxu0 0
        %774 = vmatprep.subr.bf16.mxu0 0
        %775 = vmatpush1.bf16.msra.mxu0 0
        %776 = vmatprep.subr.bf16.mxu0 0
        %777 = vmatpush1.bf16.msra.mxu0 0
        %778 = vmatprep.subr.bf16.mxu0 0
        %779 = vmatpush1.bf16.msra.mxu0 0
        %780 = vmatprep.subr.bf16.mxu0 0
        %781 = vmatpush1.bf16.msra.mxu0 0
        %782 = vmatprep.subr.bf16.mxu0 0
        %783 = vmatpush1.bf16.msra.mxu0 0
        %784 = vmatprep.subr.bf16.mxu0 0
        %785 = vmatpush1.bf16.msra.mxu0 0
        %786 = vmatprep.subr.bf16.mxu0 0
        %787 = vmatpush1.bf16.msra.mxu0 0
        %788 = vmatprep.subr.bf16.mxu0 0
        %789 = vmatpush1.bf16.msra.mxu0 0
        %790 = vmatprep.subr.bf16.mxu0 0
        %791 = vmatpush1.bf16.msra.mxu0 0
        %792 = vmatprep.subr.bf16.mxu0 0
        %793 = vmatpush1.bf16.msra.mxu0 0
        %794 = vmatprep.subr.bf16.mxu0 0
        %795 = vmatpush1.bf16.msra.mxu0 0
        %796 = vmatprep.mubr.bf16.mxu0 0
        %797 = vmatmul.mubr.bf16.gmra.mrb[0].mxu0 %v758
        %v798 = vpop.f32.mrb[0].mxu0
        %v799 = vadd.f32 0.0, %v798
        %v800 = vpop.f32.mrb[0].mxu0
        %v801 = vpop.f32.mrb[0].mxu0
        %v802 = vpop.f32.mrb[0].mxu0
        %803 = vdwg.mxu0
        %v804 = vpack.c.bf16 %v799, %v799
        %v805 = vld [vmem:[#allocation18] sm:$0xf]
        %v806 = vld [vmem:[#allocation18 + $0x4] sm:$0xf]
        %v807 = vld [vmem:[#allocation18 + $0x8] sm:$0xf]
        %v808 = vld [vmem:[#allocation18 + $0xc] sm:$0xf]
        %v813 = vunpack.c.l.b16 %v805
        %v814 = vunpack.c.l.b16 %v806
        %v815 = vunpack.c.l.b16 %v807
        %v816 = vunpack.c.l.b16 %v808
        %v817 = vpack.c.b16 %v814, %v813
        %v818 = vpack.c.b16 %v816, %v815
        %v822 = vsel %vm697, %v804, 0
        %824 = vmatprep.subr.bf16.mxu0 0
        %825 = vmatpush1.bf16.msra.mxu0 %v817
        %826 = vmatprep.subr.bf16.mxu0 0
        %827 = vmatpush1.bf16.msra.mxu0 %v818
        %828 = vmatprep.subr.bf16.mxu0 0
        %829 = vmatpush1.bf16.msra.mxu0 0
        %830 = vmatprep.subr.bf16.mxu0 0
        %831 = vmatpush1.bf16.msra.mxu0 0
        %832 = vmatprep.subr.bf16.mxu0 0
        %833 = vmatpush1.bf16.msra.mxu0 0
        %834 = vmatprep.subr.bf16.mxu0 0
        %835 = vmatpush1.bf16.msra.mxu0 0
        %836 = vmatprep.subr.bf16.mxu0 0
        %837 = vmatpush1.bf16.msra.mxu0 0
        %838 = vmatprep.subr.bf16.mxu0 0
        %839 = vmatpush1.bf16.msra.mxu0 0
        %840 = vmatprep.subr.bf16.mxu0 0
        %841 = vmatpush1.bf16.msra.mxu0 0
        %842 = vmatprep.subr.bf16.mxu0 0
        %843 = vmatpush1.bf16.msra.mxu0 0
        %844 = vmatprep.subr.bf16.mxu0 0
        %845 = vmatpush1.bf16.msra.mxu0 0
        %846 = vmatprep.subr.bf16.mxu0 0
        %847 = vmatpush1.bf16.msra.mxu0 0
        %848 = vmatprep.subr.bf16.mxu0 0
        %849 = vmatpush1.bf16.msra.mxu0 0
        %850 = vmatprep.subr.bf16.mxu0 0
        %851 = vmatpush1.bf16.msra.mxu0 0
        %852 = vmatprep.subr.bf16.mxu0 0
        %853 = vmatpush1.bf16.msra.mxu0 0
        %854 = vmatprep.subr.bf16.mxu0 0
        %855 = vmatpush1.bf16.msra.mxu0 0
        %856 = vmatprep.mubr.bf16.mxu0 0
        %857 = vmatmul.mubr.bf16.gmra.mrb[0].mxu0 %v822
        %v858 = vpop.f32.mrb[0].mxu0
        %v859 = vadd.f32 0.0, %v858
        %v860 = vpop.f32.mrb[0].mxu0
        %v861 = vpop.f32.mrb[0].mxu0
        %v862 = vpop.f32.mrb[0].mxu0
        %863 = vdwg.mxu0
        %864 = vst [vmem:[#allocation4] sm:$0xff] %v859
        %866 = vrot.lane.b32.xlu0 %v688, 96
        %v867 = vpop.permute.xlu0 %866
        %v869 = vunpack.c.l.b16 %v689
        %v870 = vpack.c.b16 %v869, %v869
        %871 = vrot.lane.b32.xlu0 %v870, 96
        %v872 = vpop.permute.xlu0 %871
        %v874 = vsel %vm697, %v867, 0
        %v877 = vsel %vm697, %v872, 0
        %879 = vmatprep.subr.bf16.mxu0 0
        %880 = vmatpush1.bf16.xpose.msra.mxu0 %v877
        %881 = vmatprep.subr.bf16.mxu0 0
        %882 = vmatpush1.bf16.xpose.msra.mxu0 0
        %883 = vmatprep.subr.bf16.mxu0 0
        %884 = vmatpush1.bf16.xpose.msra.mxu0 0
        %885 = vmatprep.subr.bf16.mxu0 0
        %886 = vmatpush1.bf16.xpose.msra.mxu0 0
        %887 = vmatprep.subr.bf16.mxu0 0
        %888 = vmatpush1.bf16.xpose.msra.mxu0 0
        %889 = vmatprep.subr.bf16.mxu0 0
        %890 = vmatpush1.bf16.xpose.msra.mxu0 0
        %891 = vmatprep.subr.bf16.mxu0 0
        %892 = vmatpush1.bf16.xpose.msra.mxu0 0
        %893 = vmatprep.subr.bf16.mxu0 0
        %894 = vmatpush1.bf16.xpose.msra.mxu0 0
        %895 = vmatprep.subr.bf16.mxu0 0
        %896 = vmatpush1.bf16.xpose.msra.mxu0 0
        %897 = vmatprep.subr.bf16.mxu0 0
        %898 = vmatpush1.bf16.xpose.msra.mxu0 0
        %899 = vmatprep.subr.bf16.mxu0 0
        %900 = vmatpush1.bf16.xpose.msra.mxu0 0
        %901 = vmatprep.subr.bf16.mxu0 0
        %902 = vmatpush1.bf16.xpose.msra.mxu0 0
        %903 = vmatprep.subr.bf16.mxu0 0
        %904 = vmatpush1.bf16.xpose.msra.mxu0 0
        %905 = vmatprep.subr.bf16.mxu0 0
        %906 = vmatpush1.bf16.xpose.msra.mxu0 0
        %907 = vmatprep.subr.bf16.mxu0 0
        %908 = vmatpush1.bf16.xpose.msra.mxu0 0
        %909 = vmatprep.subr.bf16.mxu0 0
        %910 = vmatpush1.bf16.xpose.msra.mxu0 0
        %911 = vmatprep.mubr.bf16.mxu0 0
        %912 = vmatmul.mubr.bf16.gmra.mrb[0].mxu0 %v874
        %v913 = vpop.f32.mrb[0].mxu0
        %v914 = vadd.f32 %v696, %v913
        %v915 = vpop.f32.mrb[0].mxu0
        %v916 = vpop.f32.mrb[0].mxu0
        %v917 = vpop.f32.mrb[0].mxu0
        %918 = vdwg.mxu0
        %v919 = vsel %vm744, %v914, -inf
        %920 = vmax.xlane.f32.xlu0 %v919
        %v921 = vpop.xlane.xlu0 %920
        %v922 = vsub.f32 %v914, %v921
        %v923 = vmul.f32 %v922, 1.442695
        %v924 = vpow.pop %v923
        %v925 = vsel %vm744, %v924, 0.0
        %926 = vadd.xlane.f32.xlu0 %v925
        %v927 = vpop.xlane.xlu0 %926
        %v928 = vrcp.pop %v927
        %v929 = vmul.f32 %v924, %v928
        %v930 = vpack.c.bf16 %v929, %v929
        %v932 = vunpack.c.l.b16 %v690
        %v933 = vpack.c.b16 %v932, %v932
        %934 = vrot.lane.b32.xlu0 %v933, 96
        %v935 = vpop.permute.xlu0 %934
        %v937 = vsel %vm744, %v930, 0
        %v940 = vsel %vm760, %v935, 0
        %942 = vmatprep.subr.bf16.mxu0 0
        %943 = vmatpush1.bf16.msra.mxu0 %v940
        %944 = vmatprep.subr.bf16.mxu0 0
        %945 = vmatpush1.bf16.msra.mxu0 0
        %946 = vmatprep.subr.bf16.mxu0 0
        %947 = vmatpush1.bf16.msra.mxu0 0
        %948 = vmatprep.subr.bf16.mxu0 0
        %949 = vmatpush1.bf16.msra.mxu0 0
        %950 = vmatprep.subr.bf16.mxu0 0
        %951 = vmatpush1.bf16.msra.mxu0 0
        %952 = vmatprep.subr.bf16.mxu0 0
        %953 = vmatpush1.bf16.msra.mxu0 0
        %954 = vmatprep.subr.bf16.mxu0 0
        %955 = vmatpush1.bf16.msra.mxu0 0
        %956 = vmatprep.subr.bf16.mxu0 0
        %957 = vmatpush1.bf16.msra.mxu0 0
        %958 = vmatprep.subr.bf16.mxu0 0
        %959 = vmatpush1.bf16.msra.mxu0 0
        %960 = vmatprep.subr.bf16.mxu0 0
        %961 = vmatpush1.bf16.msra.mxu0 0
        %962 = vmatprep.subr.bf16.mxu0 0
        %963 = vmatpush1.bf16.msra.mxu0 0
        %964 = vmatprep.subr.bf16.mxu0 0
        %965 = vmatpush1.bf16.msra.mxu0 0
        %966 = vmatprep.subr.bf16.mxu0 0
        %967 = vmatpush1.bf16.msra.mxu0 0
        %968 = vmatprep.subr.bf16.mxu0 0
        %969 = vmatpush1.bf16.msra.mxu0 0
        %970 = vmatprep.subr.bf16.mxu0 0
        %971 = vmatpush1.bf16.msra.mxu0 0
        %972 = vmatprep.subr.bf16.mxu0 0
        %973 = vmatpush1.bf16.msra.mxu0 0
        %974 = vmatprep.mubr.bf16.mxu0 0
        %975 = vmatmul.mubr.bf16.gmra.mrb[0].mxu0 %v937
        %v976 = vpop.f32.mrb[0].mxu0
        %v977 = vadd.f32 0.0, %v976
        %v978 = vpop.f32.mrb[0].mxu0
        %v979 = vpop.f32.mrb[0].mxu0
        %v980 = vpop.f32.mrb[0].mxu0
        %981 = vdwg.mxu0
        %v982 = vpack.c.bf16 %v977, %v977
        %v983 = vld [vmem:[#allocation18 + $0x10] sm:$0xf]
        %v984 = vld [vmem:[#allocation18 + $0x14] sm:$0xf]
        %v985 = vld [vmem:[#allocation18 + $0x18] sm:$0xf]
        %v986 = vld [vmem:[#allocation18 + $0x1c] sm:$0xf]
        %v991 = vunpack.c.l.b16 %v983
        %v992 = vunpack.c.l.b16 %v984
        %v993 = vunpack.c.l.b16 %v985
        %v994 = vunpack.c.l.b16 %v986
        %v995 = vpack.c.b16 %v992, %v991
        %v996 = vpack.c.b16 %v994, %v993
        %v1000 = vsel %vm697, %v982, 0
        %1002 = vmatprep.subr.bf16.mxu0 0
        %1003 = vmatpush1.bf16.msra.mxu0 %v995
        %1004 = vmatprep.subr.bf16.mxu0 0
        %1005 = vmatpush1.bf16.msra.mxu0 %v996
        %1006 = vmatprep.subr.bf16.mxu0 0
        %1007 = vmatpush1.bf16.msra.mxu0 0
        %1008 = vmatprep.subr.bf16.mxu0 0
        %1009 = vmatpush1.bf16.msra.mxu0 0
        %1010 = vmatprep.subr.bf16.mxu0 0
        %1011 = vmatpush1.bf16.msra.mxu0 0
        %1012 = vmatprep.subr.bf16.mxu0 0
        %1013 = vmatpush1.bf16.msra.mxu0 0
        %1014 = vmatprep.subr.bf16.mxu0 0
        %1015 = vmatpush1.bf16.msra.mxu0 0
        %1016 = vmatprep.subr.bf16.mxu0 0
        %1017 = vmatpush1.bf16.msra.mxu0 0
        %1018 = vmatprep.subr.bf16.mxu0 0
        %1019 = vmatpush1.bf16.msra.mxu0 0
        %1020 = vmatprep.subr.bf16.mxu0 0
        %1021 = vmatpush1.bf16.msra.mxu0 0
        %1022 = vmatprep.subr.bf16.mxu0 0
        %1023 = vmatpush1.bf16.msra.mxu0 0
        %1024 = vmatprep.subr.bf16.mxu0 0
        %1025 = vmatpush1.bf16.msra.mxu0 0
        %1026 = vmatprep.subr.bf16.mxu0 0
        %1027 = vmatpush1.bf16.msra.mxu0 0
        %1028 = vmatprep.subr.bf16.mxu0 0
        %1029 = vmatpush1.bf16.msra.mxu0 0
        %1030 = vmatprep.subr.bf16.mxu0 0
        %1031 = vmatpush1.bf16.msra.mxu0 0
        %1032 = vmatprep.subr.bf16.mxu0 0
        %1033 = vmatpush1.bf16.msra.mxu0 0
        %1034 = vmatprep.mubr.bf16.mxu0 0
        %1035 = vmatmul.mubr.bf16.gmra.mrb[0].mxu0 %v1000
        %v1036 = vpop.f32.mrb[0].mxu0
        %v1037 = vadd.f32 0.0, %v1036
        %v1038 = vpop.f32.mrb[0].mxu0
        %v1039 = vpop.f32.mrb[0].mxu0
        %v1040 = vpop.f32.mrb[0].mxu0
        %1041 = vdwg.mxu0
        %v1042 = vld [vmem:[#allocation4] sm:$0xff]
        %v1043 = vadd.f32 %v1042, %v1037
        %1044 = vst [vmem:[#allocation4] sm:$0xff] %v1043
        %1045 = vrot.lane.b32.xlu0 %v688, 64
        %v1046 = vpop.permute.xlu0 %1045
        %1047 = vrot.lane.b32.xlu0 %v870, 64
        %v1048 = vpop.permute.xlu0 %1047
        %v1050 = vsel %vm697, %v1046, 0
        %v1053 = vsel %vm697, %v1048, 0
        %1055 = vmatprep.subr.bf16.mxu0 0
        %1056 = vmatpush1.bf16.xpose.msra.mxu0 %v1053
        %1057 = vmatprep.subr.bf16.mxu0 0
        %1058 = vmatpush1.bf16.xpose.msra.mxu0 0
        %1059 = vmatprep.subr.bf16.mxu0 0
        %1060 = vmatpush1.bf16.xpose.msra.mxu0 0
        %1061 = vmatprep.subr.bf16.mxu0 0
        %1062 = vmatpush1.bf16.xpose.msra.mxu0 0
        %1063 = vmatprep.subr.bf16.mxu0 0
        %1064 = vmatpush1.bf16.xpose.msra.mxu0 0
        %1065 = vmatprep.subr.bf16.mxu0 0
        %1066 = vmatpush1.bf16.xpose.msra.mxu0 0
        %1067 = vmatprep.subr.bf16.mxu0 0
        %1068 = vmatpush1.bf16.xpose.msra.mxu0 0
        %1069 = vmatprep.subr.bf16.mxu0 0
        %1070 = vmatpush1.bf16.xpose.msra.mxu0 0
        %1071 = vmatprep.subr.bf16.mxu0 0
        %1072 = vmatpush1.bf16.xpose.msra.mxu0 0
        %1073 = vmatprep.subr.bf16.mxu0 0
        %1074 = vmatpush1.bf16.xpose.msra.mxu0 0
        %1075 = vmatprep.subr.bf16.mxu0 0
        %1076 = vmatpush1.bf16.xpose.msra.mxu0 0
        %1077 = vmatprep.subr.bf16.mxu0 0
        %1078 = vmatpush1.bf16.xpose.msra.mxu0 0
        %1079 = vmatprep.subr.bf16.mxu0 0
        %1080 = vmatpush1.bf16.xpose.msra.mxu0 0
        %1081 = vmatprep.subr.bf16.mxu0 0
        %1082 = vmatpush1.bf16.xpose.msra.mxu0 0
        %1083 = vmatprep.subr.bf16.mxu0 0
        %1084 = vmatpush1.bf16.xpose.msra.mxu0 0
        %1085 = vmatprep.subr.bf16.mxu0 0
        %1086 = vmatpush1.bf16.xpose.msra.mxu0 0
        %1087 = vmatprep.mubr.bf16.mxu0 0
        %1088 = vmatmul.mubr.bf16.gmra.mrb[0].mxu0 %v1050
        %v1089 = vpop.f32.mrb[0].mxu0
        %v1090 = vadd.f32 %v696, %v1089
        %v1091 = vpop.f32.mrb[0].mxu0
        %v1092 = vpop.f32.mrb[0].mxu0
        %v1093 = vpop.f32.mrb[0].mxu0
        %1094 = vdwg.mxu0
        %v1095 = vsel %vm744, %v1090, -inf
        %1096 = vmax.xlane.f32.xlu0 %v1095
        %v1097 = vpop.xlane.xlu0 %1096
        %v1098 = vsub.f32 %v1090, %v1097
        %v1099 = vmul.f32 %v1098, 1.442695
        %v1100 = vpow.pop %v1099
        %v1101 = vsel %vm744, %v1100, 0.0
        %1102 = vadd.xlane.f32.xlu0 %v1101
        %v1103 = vpop.xlane.xlu0 %1102
        %v1104 = vrcp.pop %v1103
        %v1105 = vmul.f32 %v1100, %v1104
        %v1106 = vpack.c.bf16 %v1105, %v1105
        %1107 = vrot.lane.b32.xlu0 %v933, 64
        %v1108 = vpop.permute.xlu0 %1107
        %v1110 = vsel %vm744, %v1106, 0
        %v1113 = vsel %vm760, %v1108, 0
        %1115 = vmatprep.subr.bf16.mxu0 0
        %1116 = vmatpush1.bf16.msra.mxu0 %v1113
        %1117 = vmatprep.subr.bf16.mxu0 0
        %1118 = vmatpush1.bf16.msra.mxu0 0
        %1119 = vmatprep.subr.bf16.mxu0 0
        %1120 = vmatpush1.bf16.msra.mxu0 0
        %1121 = vmatprep.subr.bf16.mxu0 0
        %1122 = vmatpush1.bf16.msra.mxu0 0
        %1123 = vmatprep.subr.bf16.mxu0 0
        %1124 = vmatpush1.bf16.msra.mxu0 0
        %1125 = vmatprep.subr.bf16.mxu0 0
        %1126 = vmatpush1.bf16.msra.mxu0 0
        %1127 = vmatprep.subr.bf16.mxu0 0
        %1128 = vmatpush1.bf16.msra.mxu0 0
        %1129 = vmatprep.subr.bf16.mxu0 0
        %1130 = vmatpush1.bf16.msra.mxu0 0
        %1131 = vmatprep.subr.bf16.mxu0 0
        %1132 = vmatpush1.bf16.msra.mxu0 0
        %1133 = vmatprep.subr.bf16.mxu0 0
        %1134 = vmatpush1.bf16.msra.mxu0 0
        %1135 = vmatprep.subr.bf16.mxu0 0
        %1136 = vmatpush1.bf16.msra.mxu0 0
        %1137 = vmatprep.subr.bf16.mxu0 0
        %1138 = vmatpush1.bf16.msra.mxu0 0
        %1139 = vmatprep.subr.bf16.mxu0 0
        %1140 = vmatpush1.bf16.msra.mxu0 0
        %1141 = vmatprep.subr.bf16.mxu0 0
        %1142 = vmatpush1.bf16.msra.mxu0 0
        %1143 = vmatprep.subr.bf16.mxu0 0
        %1144 = vmatpush1.bf16.msra.mxu0 0
        %1145 = vmatprep.subr.bf16.mxu0 0
        %1146 = vmatpush1.bf16.msra.mxu0 0
        %1147 = vmatprep.mubr.bf16.mxu0 0
        %1148 = vmatmul.mubr.bf16.gmra.mrb[0].mxu0 %v1110
        %v1149 = vpop.f32.mrb[0].mxu0
        %v1150 = vadd.f32 0.0, %v1149
        %v1151 = vpop.f32.mrb[0].mxu0
        %v1152 = vpop.f32.mrb[0].mxu0
        %v1153 = vpop.f32.mrb[0].mxu0
        %1154 = vdwg.mxu0
        %v1155 = vpack.c.bf16 %v1150, %v1150
        %v1156 = vld [vmem:[#allocation18 + $0x20] sm:$0xf]
        %v1157 = vld [vmem:[#allocation18 + $0x24] sm:$0xf]
        %v1158 = vld [vmem:[#allocation18 + $0x28] sm:$0xf]
        %v1159 = vld [vmem:[#allocation18 + $0x2c] sm:$0xf]
        %v1164 = vunpack.c.l.b16 %v1156
        %v1165 = vunpack.c.l.b16 %v1157
        %v1166 = vunpack.c.l.b16 %v1158
        %v1167 = vunpack.c.l.b16 %v1159
        %v1168 = vpack.c.b16 %v1165, %v1164
        %v1169 = vpack.c.b16 %v1167, %v1166
        %v1173 = vsel %vm697, %v1155, 0
        %1175 = vmatprep.subr.bf16.mxu0 0
        %1176 = vmatpush1.bf16.msra.mxu0 %v1168
        %1177 = vmatprep.subr.bf16.mxu0 0
        %1178 = vmatpush1.bf16.msra.mxu0 %v1169
        %1179 = vmatprep.subr.bf16.mxu0 0
        %1180 = vmatpush1.bf16.msra.mxu0 0
        %1181 = vmatprep.subr.bf16.mxu0 0
        %1182 = vmatpush1.bf16.msra.mxu0 0
        %1183 = vmatprep.subr.bf16.mxu0 0
        %1184 = vmatpush1.bf16.msra.mxu0 0
        %1185 = vmatprep.subr.bf16.mxu0 0
        %1186 = vmatpush1.bf16.msra.mxu0 0
        %1187 = vmatprep.subr.bf16.mxu0 0
        %1188 = vmatpush1.bf16.msra.mxu0 0
        %1189 = vmatprep.subr.bf16.mxu0 0
        %1190 = vmatpush1.bf16.msra.mxu0 0
        %1191 = vmatprep.subr.bf16.mxu0 0
        %1192 = vmatpush1.bf16.msra.mxu0 0
        %1193 = vmatprep.subr.bf16.mxu0 0
        %1194 = vmatpush1.bf16.msra.mxu0 0
        %1195 = vmatprep.subr.bf16.mxu0 0
        %1196 = vmatpush1.bf16.msra.mxu0 0
        %1197 = vmatprep.subr.bf16.mxu0 0
        %1198 = vmatpush1.bf16.msra.mxu0 0
        %1199 = vmatprep.subr.bf16.mxu0 0
        %1200 = vmatpush1.bf16.msra.mxu0 0
        %1201 = vmatprep.subr.bf16.mxu0 0
        %1202 = vmatpush1.bf16.msra.mxu0 0
        %1203 = vmatprep.subr.bf16.mxu0 0
        %1204 = vmatpush1.bf16.msra.mxu0 0
        %1205 = vmatprep.subr.bf16.mxu0 0
        %1206 = vmatpush1.bf16.msra.mxu0 0
        %1207 = vmatprep.mubr.bf16.mxu0 0
        %1208 = vmatmul.mubr.bf16.gmra.mrb[0].mxu0 %v1173
        %v1209 = vpop.f32.mrb[0].mxu0
        %v1210 = vadd.f32 0.0, %v1209
        %v1211 = vpop.f32.mrb[0].mxu0
        %v1212 = vpop.f32.mrb[0].mxu0
        %v1213 = vpop.f32.mrb[0].mxu0
        %1214 = vdwg.mxu0
        %v1215 = vld [vmem:[#allocation4] sm:$0xff]
        %v1216 = vadd.f32 %v1215, %v1210
        %1217 = vst [vmem:[#allocation4] sm:$0xff] %v1216
        %1218 = vrot.lane.b32.xlu0 %v688, 32
        %v1219 = vpop.permute.xlu0 %1218
        %1220 = vrot.lane.b32.xlu0 %v870, 32
        %v1221 = vpop.permute.xlu0 %1220
        %v1223 = vsel %vm697, %v1219, 0
        %v1226 = vsel %vm697, %v1221, 0
        %1228 = vmatprep.subr.bf16.mxu0 0
        %1229 = vmatpush1.bf16.xpose.msra.mxu0 %v1226
        %1230 = vmatprep.subr.bf16.mxu0 0
        %1231 = vmatpush1.bf16.xpose.msra.mxu0 0
        %1232 = vmatprep.subr.bf16.mxu0 0
        %1233 = vmatpush1.bf16.xpose.msra.mxu0 0
        %1234 = vmatprep.subr.bf16.mxu0 0
        %1235 = vmatpush1.bf16.xpose.msra.mxu0 0
        %1236 = vmatprep.subr.bf16.mxu0 0
        %1237 = vmatpush1.bf16.xpose.msra.mxu0 0
        %1238 = vmatprep.subr.bf16.mxu0 0
        %1239 = vmatpush1.bf16.xpose.msra.mxu0 0
        %1240 = vmatprep.subr.bf16.mxu0 0
        %1241 = vmatpush1.bf16.xpose.msra.mxu0 0
        %1242 = vmatprep.subr.bf16.mxu0 0
        %1243 = vmatpush1.bf16.xpose.msra.mxu0 0
        %1244 = vmatprep.subr.bf16.mxu0 0
        %1245 = vmatpush1.bf16.xpose.msra.mxu0 0
        %1246 = vmatprep.subr.bf16.mxu0 0
        %1247 = vmatpush1.bf16.xpose.msra.mxu0 0
        %1248 = vmatprep.subr.bf16.mxu0 0
        %1249 = vmatpush1.bf16.xpose.msra.mxu0 0
        %1250 = vmatprep.subr.bf16.mxu0 0
        %1251 = vmatpush1.bf16.xpose.msra.mxu0 0
        %1252 = vmatprep.subr.bf16.mxu0 0
        %1253 = vmatpush1.bf16.xpose.msra.mxu0 0
        %1254 = vmatprep.subr.bf16.mxu0 0
        %1255 = vmatpush1.bf16.xpose.msra.mxu0 0
        %1256 = vmatprep.subr.bf16.mxu0 0
        %1257 = vmatpush1.bf16.xpose.msra.mxu0 0
        %1258 = vmatprep.subr.bf16.mxu0 0
        %1259 = vmatpush1.bf16.xpose.msra.mxu0 0
        %1260 = vmatprep.mubr.bf16.mxu0 0
        %1261 = vmatmul.mubr.bf16.gmra.mrb[0].mxu0 %v1223
        %v1262 = vpop.f32.mrb[0].mxu0
        %v1263 = vadd.f32 %v696, %v1262
        %v1264 = vpop.f32.mrb[0].mxu0
        %v1265 = vpop.f32.mrb[0].mxu0
        %v1266 = vpop.f32.mrb[0].mxu0
        %1267 = vdwg.mxu0
        %v1268 = vsel %vm744, %v1263, -inf
        %1269 = vmax.xlane.f32.xlu0 %v1268
        %v1270 = vpop.xlane.xlu0 %1269
        %v1271 = vsub.f32 %v1263, %v1270
        %v1272 = vmul.f32 %v1271, 1.442695
        %v1273 = vpow.pop %v1272
        %v1274 = vsel %vm744, %v1273, 0.0
        %1275 = vadd.xlane.f32.xlu0 %v1274
        %v1276 = vpop.xlane.xlu0 %1275
        %v1277 = vrcp.pop %v1276
        %v1278 = vmul.f32 %v1273, %v1277
        %v1279 = vpack.c.bf16 %v1278, %v1278
        %1280 = vrot.lane.b32.xlu0 %v933, 32
        %v1281 = vpop.permute.xlu0 %1280
        %v1283 = vsel %vm744, %v1279, 0
        %v1286 = vsel %vm760, %v1281, 0
        %1288 = vmatprep.subr.bf16.mxu0 0
        %1289 = vmatpush1.bf16.msra.mxu0 %v1286
        %1290 = vmatprep.subr.bf16.mxu0 0
        %1291 = vmatpush1.bf16.msra.mxu0 0
        %1292 = vmatprep.subr.bf16.mxu0 0
        %1293 = vmatpush1.bf16.msra.mxu0 0
        %1294 = vmatprep.subr.bf16.mxu0 0
        %1295 = vmatpush1.bf16.msra.mxu0 0
        %1296 = vmatprep.subr.bf16.mxu0 0
        %1297 = vmatpush1.bf16.msra.mxu0 0
        %1298 = vmatprep.subr.bf16.mxu0 0
        %1299 = vmatpush1.bf16.msra.mxu0 0
        %1300 = vmatprep.subr.bf16.mxu0 0
        %1301 = vmatpush1.bf16.msra.mxu0 0
        %1302 = vmatprep.subr.bf16.mxu0 0
        %1303 = vmatpush1.bf16.msra.mxu0 0
        %1304 = vmatprep.subr.bf16.mxu0 0
        %1305 = vmatpush1.bf16.msra.mxu0 0
        %1306 = vmatprep.subr.bf16.mxu0 0
        %1307 = vmatpush1.bf16.msra.mxu0 0
        %1308 = vmatprep.subr.bf16.mxu0 0
        %1309 = vmatpush1.bf16.msra.mxu0 0
        %1310 = vmatprep.subr.bf16.mxu0 0
        %1311 = vmatpush1.bf16.msra.mxu0 0
        %1312 = vmatprep.subr.bf16.mxu0 0
        %1313 = vmatpush1.bf16.msra.mxu0 0
        %1314 = vmatprep.subr.bf16.mxu0 0
        %1315 = vmatpush1.bf16.msra.mxu0 0
        %1316 = vmatprep.subr.bf16.mxu0 0
        %1317 = vmatpush1.bf16.msra.mxu0 0
        %1318 = vmatprep.subr.bf16.mxu0 0
        %1319 = vmatpush1.bf16.msra.mxu0 0
        %1320 = vmatprep.mubr.bf16.mxu0 0
        %1321 = vmatmul.mubr.bf16.gmra.mrb[0].mxu0 %v1283
        %v1322 = vpop.f32.mrb[0].mxu0
        %v1323 = vadd.f32 0.0, %v1322
        %v1324 = vpop.f32.mrb[0].mxu0
        %v1325 = vpop.f32.mrb[0].mxu0
        %v1326 = vpop.f32.mrb[0].mxu0
        %1327 = vdwg.mxu0
        %v1328 = vpack.c.bf16 %v1323, %v1323
        %v1329 = vld [vmem:[#allocation18 + $0x30] sm:$0xf]
        %v1330 = vld [vmem:[#allocation18 + $0x34] sm:$0xf]
        %v1331 = vld [vmem:[#allocation18 + $0x38] sm:$0xf]
        %v1332 = vld [vmem:[#allocation18 + $0x3c] sm:$0xf]
        %v1337 = vunpack.c.l.b16 %v1329
        %v1338 = vunpack.c.l.b16 %v1330
        %v1339 = vunpack.c.l.b16 %v1331
        %v1340 = vunpack.c.l.b16 %v1332
        %v1341 = vpack.c.b16 %v1338, %v1337
        %v1342 = vpack.c.b16 %v1340, %v1339
        %v1346 = vsel %vm697, %v1328, 0
        %1348 = vmatprep.subr.bf16.mxu0 0
        %1349 = vmatpush1.bf16.msra.mxu0 %v1341
        %1350 = vmatprep.subr.bf16.mxu0 0
        %1351 = vmatpush1.bf16.msra.mxu0 %v1342
        %1352 = vmatprep.subr.bf16.mxu0 0
        %1353 = vmatpush1.bf16.msra.mxu0 0
        %1354 = vmatprep.subr.bf16.mxu0 0
        %1355 = vmatpush1.bf16.msra.mxu0 0
        %1356 = vmatprep.subr.bf16.mxu0 0
        %1357 = vmatpush1.bf16.msra.mxu0 0
        %1358 = vmatprep.subr.bf16.mxu0 0
        %1359 = vmatpush1.bf16.msra.mxu0 0
        %1360 = vmatprep.subr.bf16.mxu0 0
        %1361 = vmatpush1.bf16.msra.mxu0 0
        %1362 = vmatprep.subr.bf16.mxu0 0
        %1363 = vmatpush1.bf16.msra.mxu0 0
        %1364 = vmatprep.subr.bf16.mxu0 0
        %1365 = vmatpush1.bf16.msra.mxu0 0
        %1366 = vmatprep.subr.bf16.mxu0 0
        %1367 = vmatpush1.bf16.msra.mxu0 0
        %1368 = vmatprep.subr.bf16.mxu0 0
        %1369 = vmatpush1.bf16.msra.mxu0 0
        %1370 = vmatprep.subr.bf16.mxu0 0
        %1371 = vmatpush1.bf16.msra.mxu0 0
        %1372 = vmatprep.subr.bf16.mxu0 0
        %1373 = vmatpush1.bf16.msra.mxu0 0
        %1374 = vmatprep.subr.bf16.mxu0 0
        %1375 = vmatpush1.bf16.msra.mxu0 0
        %1376 = vmatprep.subr.bf16.mxu0 0
        %1377 = vmatpush1.bf16.msra.mxu0 0
        %1378 = vmatprep.subr.bf16.mxu0 0
        %1379 = vmatpush1.bf16.msra.mxu0 0
        %1380 = vmatprep.mubr.bf16.mxu0 0
        %1381 = vmatmul.mubr.bf16.gmra.mrb[0].mxu0 %v1346
        %v1382 = vpop.f32.mrb[0].mxu0
        %v1383 = vadd.f32 0.0, %v1382
        %v1384 = vpop.f32.mrb[0].mxu0
        %v1385 = vpop.f32.mrb[0].mxu0
        %v1386 = vpop.f32.mrb[0].mxu0
        %1387 = vdwg.mxu0
        %v1388 = vld [vmem:[#allocation4] sm:$0xff]
        %v1389 = vadd.f32 %v1388, %v1383
        %1390 = vst [vmem:[#allocation4] sm:$0xff] %v1389
        %v1391 = vld [vmem:[#allocation4] sm:$0xff]
        %1392 = vst [vmem:[%s444] sm:$0xff] %v1391
        %s1393 = sand.u32 %s220, 1
        %s1394 = scalar_lea.sflag [#allocation9], %s1393
        %s1395 = sand.u32 %s220, 1
        %s1396 = smul.addr %s1395, 8
        %s1397 = scalar_lea.vmem [#allocation19], %s1396
        // Predicated region
        $region81: #{tpu_custom_call.1} parent=47 // pred_check
          %p1398 = pneg %p230
        $region82: #{tpu_custom_call.1} parent=47 // pred_check_branch
          %1400 = sbr.rel (%p1398) target = $region84
        $region83: #{tpu_custom_call.1} parent=47 // pred_region
          %s1402 = ssub.s32 128, 128
          %1403 = vsyncadd %s1394, %s1402
          %s1404 = sadd.s32 %s39, %s38
          %s1405 = smul.addr %s1404, 128
          %s1406 = scalar_lea.hbm %s8, %s1405
          %s1408 = sshll.u32 %s1397, 4
          %s1409 = int_to_ptr.vmem [resolvable:$true] %s1408
          %1411 = dma.vmem_to_hbm [thread:$0]  %s1409, 128, %s1406, %s1394
        $region84: #{tpu_custom_call.1} parent=47 // pred_fallthru
          _
      $region48: #{tpu_custom_call.1} parent=5 // pred_fallthru
        _
      %p1412 = scmp.le.s32.totalorder 2, %s29
      // Predicated region
      $region85: #{tpu_custom_call.1} parent=5 // pred_check
        %p1413 = pneg %p1412
      $region86: #{tpu_custom_call.1} parent=5 // pred_check_branch
        %1415 = sbr.rel (%p1413) target = $region88
      $region87: #{tpu_custom_call.1} parent=5 // pred_region
        %s1416 = ssub.s32 %s29, 2
        // Predicated region
        $region89: #{tpu_custom_call.1} parent=87 // pred_check
          %p1417 = pneg %p236
        $region90: #{tpu_custom_call.1} parent=87 // pred_check_branch
          %1419 = sbr.rel (%p1417) target = $region92
        $region91: #{tpu_custom_call.1} parent=87 // pred_region
          %s1420 = sand.u32 %s221, 1
          %s1421 = scalar_lea.sflag [#allocation9], %s1420
          %s1422 = sand.u32 %s221, 1
          %s1423 = smul.addr %s1422, 8
          %s1424 = scalar_lea.vmem [#allocation19], %s1423
          %1425 = dma.done %s1421, 128
        $region92: #{tpu_custom_call.1} parent=87 // pred_fallthru
          _
      $region88: #{tpu_custom_call.1} parent=5 // pred_fallthru
        _
    $region6: #{tpu_custom_call.1} parent=1 // loop_footer
      %s33 = sadd.s32 1, %s29
    $region7: #{tpu_custom_call.1} parent=1 // loop_footer_branch
      %28 = sbr.rel target = $region3
    $region8: #{tpu_custom_call.1} parent=1 // loop_exit
      _
    %1426 = vsyncpa [#allocation8], 1
    %s1427 = scalar_lea.sflag [#allocation8], 1
    %1428 = vsyncpa %s1427, 1
    %1429 = vsyncpa [#allocation11], 1
    %s1430 = scalar_lea.sflag [#allocation11], 1
    %1431 = vsyncpa %s1430, 1
    %1432 = vsyncpa [#allocation14], 1
    %1433 = vsyncpa [#allocation17], 1
    %1434 = vsyncpa [#allocation9], 1
    %s1435 = scalar_lea.sflag [#allocation9], 1
    %1436 = vsyncpa %s1435, 1

</llo_original>
